<compile_context>
chip_gen: v7x
topology: tpu7x:2x2x1
jax: 0.10.0
libtpu: 0.0.40
codegen_flags: <defaults>
</compile_context>

<pallas_src>
import jax
import jax.numpy as jnp
from jax import lax
from jax.experimental import pallas as pl
from jax.experimental.pallas import tpu as pltpu

NHIDDEN = 128          # ADAIN mlp hidden width (fixed in the module)
EPS = 1e-5             # nn.InstanceNorm2d default eps
LANE = 128             # TPU lane width


# ---------------------------------------------------------------------------
# Pallas kernel: one (batch, row-tile) step per grid point.
# ---------------------------------------------------------------------------
def _make_kernel(TR, W, Cp, HW):
    TRW = TR * W

    def kernel(xt_ref, g1_ref, bt_ref, w_ref, b_ref, o_ref,
               sum_ref, ssq_ref, xres_ref):
        t = pl.program_id(1)

        @pl.when(t == 0)
        def _():
            sum_ref[...] = jnp.zeros_like(sum_ref)
            ssq_ref[...] = jnp.zeros_like(ssq_ref)

        xt = xt_ref[0]                         # (TR+2, W+2, Cp) f32 halo tile
        xb = xt.astype(jnp.bfloat16)           # bf16 operands for the MXU

        start = pl.multiple_of(t * TRW, TRW)

        # Residual (center region of the halo tile), kept in f32.
        xres_ref[pl.ds(start, TRW), :] = xt[1:1 + TR, 1:1 + W, :].reshape(TRW, Cp)

        # 3x3 conv (stride 1, pad 1) = 9 shifted matmuls, f32 accumulation.
        acc = jnp.zeros((TRW, Cp), jnp.float32)
        for ky in range(3):
            for kx in range(3):
                patch = xb[ky:ky + TR, kx:kx + W, :].reshape(TRW, Cp)
                acc = acc + jnp.dot(patch, w_ref[ky * 3 + kx],
                                    preferred_element_type=jnp.float32)
        y = acc + b_ref[...]                   # (TRW, Cp)

        # Single-pass InstanceNorm statistics (sum / sum-of-squares).
        sum_ref[...] += jnp.sum(y, axis=0, keepdims=True)
        ssq_ref[...] += jnp.sum(y * y, axis=0, keepdims=True)

        # Stage the conv result in the batch-resident output block.
        o_ref[0, pl.ds(start, TRW), :] = y

        # After the last spatial tile: normalize + ADAIN + residual, in place.
        @pl.when(t == pl.num_programs(1) - 1)
        def _():
            inv_hw = 1.0 / float(HW)
            mean = sum_ref[...] * inv_hw
            var = jnp.maximum(ssq_ref[...] * inv_hw - mean * mean, 0.0)
            rstd = lax.rsqrt(var + EPS)
            scale = g1_ref[0] * rstd                 # (1, Cp) = (1+gamma)/std
            shift = bt_ref[0] - mean * scale         # (1, Cp)
            o_ref[0] = o_ref[0] * scale + shift + xres_ref[...]

    return kernel


# ---------------------------------------------------------------------------
# pallas_call wrapper for a single residual block.
# ---------------------------------------------------------------------------
def _run_block(x_nhwc_p, g1_p, beta_p, w_taps, b_p, TR):
    N, H, W, Cp = x_nhwc_p.shape
    T = H // TR
    HW = H * W
    TRH, Wp = TR + 2, W + 2

    # Halo'd row tiles: (N*T, TR+2, W+2, Cp).  Only a 2-row overlap per tile.
    xp = jnp.pad(x_nhwc_p, ((0, 0), (1, 1), (1, 1), (0, 0)))
    tiles = jnp.stack([xp[:, t * TR:t * TR + TRH] for t in range(T)], axis=1)
    tiles = tiles.reshape(N * T, TRH, Wp, Cp)

    kernel = _make_kernel(TR, W, Cp, HW)

    # VMEM budget: double-buffered inputs + resident output block + scratch.
    est = (2 * TRH * Wp * Cp * 4 + 2 * 9 * Cp * Cp * 2
           + 2 * HW * Cp * 4 + HW * Cp * 4 + (1 << 20))
    vmem_limit = int(min(max(2 * est, 32 << 20), 64 << 20))

    out = pl.pallas_call(
        kernel,
        out_shape=jax.ShapeDtypeStruct((N, HW, Cp), jnp.float32),
        grid=(N, T),
        in_specs=[
            pl.BlockSpec((1, TRH, Wp, Cp), lambda n, t: (n * T + t, 0, 0, 0)),
            pl.BlockSpec((1, 1, Cp), lambda n, t: (n, 0, 0)),   # 1 + gamma
            pl.BlockSpec((1, 1, Cp), lambda n, t: (n, 0, 0)),   # beta
            pl.BlockSpec((9, Cp, Cp), lambda n, t: (0, 0, 0)),  # conv taps (bf16)
            pl.BlockSpec((1, Cp), lambda n, t: (0, 0)),         # conv bias
        ],
        out_specs=pl.BlockSpec((1, HW, Cp), lambda n, t: (n, 0, 0)),
        scratch_shapes=[
            pltpu.VMEM((1, Cp), jnp.float32),    # per-channel sum
            pltpu.VMEM((1, Cp), jnp.float32),    # per-channel sum of squares
            pltpu.VMEM((HW, Cp), jnp.float32),   # residual x for this batch elem
        ],
        compiler_params=pltpu.CompilerParams(
            dimension_semantics=("parallel", "arbitrary"),
            vmem_limit_bytes=vmem_limit),
    )(tiles, g1_p, beta_p, w_taps, b_p)
    return out.reshape(N, H, W, Cp)


# ---------------------------------------------------------------------------
# Public entry point: NCHW in / NCHW out, loops over the residual blocks.
# ---------------------------------------------------------------------------
def fine_adain_res_blocks(x_nchw, z, blocks_params, tile_rows=8):
    """x_nchw: (N, C, H, W) float32, z: (N, F) float32 -> (N, C, H, W)."""
    N, C, H, W = x_nchw.shape
    Cp = ((C + LANE - 1) // LANE) * LANE
    TR = min(tile_rows, H)
    while H % TR:
        TR -= 1

    x = jnp.transpose(x_nchw, (0, 2, 3, 1)).astype(jnp.float32)      # (N,H,W,C)
    x = jnp.pad(x, ((0, 0), (0, 0), (0, 0), (0, Cp - C)))            # lane-dense
    z2 = z.reshape(N, -1).astype(jnp.float32)

    for (w_conv, b_conv, ws, bs, wg, bg, wb, bb) in blocks_params:
        # ADAIN mlps hoisted out of the kernel (batched, well-shaped matmuls).
        actv = jnp.maximum(z2 @ ws + bs, 0.0)            # (N, 128)
        g1 = 1.0 + actv @ wg + bg                        # (N, C) = 1 + gamma
        beta = actv @ wb + bb                            # (N, C)
        g1_p = jnp.pad(g1, ((0, 0), (0, Cp - C)))[:, None, :]
        beta_p = jnp.pad(beta, ((0, 0), (0, Cp - C)))[:, None, :]

        # (Cout, Cin, kh, kw) -> (kh*3+kw, Cin_p, Cout_p), bf16 for the MXU.
        wt = jnp.transpose(w_conv, (2, 3, 1, 0)).reshape(9, C, C)
        wt = jnp.pad(wt, ((0, 0), (0, Cp - C), (0, Cp - C))).astype(jnp.bfloat16)
        b_p = jnp.pad(b_conv.reshape(1, C), ((0, 0), (0, Cp - C)))

        x = _run_block(x, g1_p, beta_p, wt, b_p, TR)

    return jnp.transpose(x[..., :C], (0, 3, 1, 2))


# ---------------------------------------------------------------------------
# Deterministic parameter init (shapes follow the PyTorch module __init__).
# ---------------------------------------------------------------------------
def init_block_params(key, C, F):
    ks = jax.random.split(key, 8)
    s = 0.1
    w_conv = jax.random.normal(ks[0], (C, C, 3, 3), jnp.float32) * s  # (Cout,Cin,3,3)
    b_conv = jax.random.normal(ks[1], (C,), jnp.float32) * s
    ws = jax.random.normal(ks[2], (F, NHIDDEN), jnp.float32) * s
    bs = jax.random.normal(ks[3], (NHIDDEN,), jnp.float32) * s
    wg = jax.random.normal(ks[4], (NHIDDEN, C), jnp.float32) * s
    bg = jax.random.normal(ks[5], (C,), jnp.float32) * s
    wb = jax.random.normal(ks[6], (NHIDDEN, C), jnp.float32) * s
    bb = jax.random.normal(ks[7], (C,), jnp.float32) * s
    return (w_conv, b_conv, ws, bs, wg, bg, wb, bb)


# ---------------------------------------------------------------------------
# Pure-JAX f32 reference (mirrors the PyTorch forward) for a correctness check.
# ---------------------------------------------------------------------------
def reference_forward(x_nchw, z, blocks_params):
    N, C, H, W = x_nchw.shape
    x = x_nchw
    z2 = z.reshape(N, -1)
    for (w_conv, b_conv, ws, bs, wg, bg, wb, bb) in blocks_params:
        y = lax.conv_general_dilated(
            x, w_conv, (1, 1), ((1, 1), (1, 1)),
            dimension_numbers=("NCHW", "OIHW", "NCHW")) + b_conv.reshape(1, C, 1, 1)
        mean = jnp.mean(y, axis=(2, 3), keepdims=True)
        var = jnp.mean((y - mean) ** 2, axis=(2, 3), keepdims=True)
        normed = (y - mean) / jnp.sqrt(var + EPS)
        actv = jnp.maximum(z2 @ ws + bs, 0.0)
        gamma = actv @ wg + bg
        beta = actv @ wb + bb
        x = normed * (1.0 + gamma[:, :, None, None]) + beta[:, :, None, None] + x
    return x


if __name__ == "__main__":
    N, C, H, W, F = 2, 4, 16, 16, 8
    NUM_BLOCK = 2

    key = jax.random.PRNGKey(0)
    kx, kz, kp = jax.random.split(key, 3)
    x = jax.random.normal(kx, (N, C, H, W), jnp.float32)
    z = jax.random.normal(kz, (N, F), jnp.float32)
    blocks_params = [init_block_params(k, C, F)
                     for k in jax.random.split(kp, NUM_BLOCK)]

    out = jax.jit(fine_adain_res_blocks)(x, z, blocks_params)
    out = jax.block_until_ready(out)

    ref = reference_forward(x, z, blocks_params)
    assert out.shape == (N, C, H, W)
    err = float(jnp.max(jnp.abs(out - ref)))
    # Tolerance sized for bf16 conv operands (f32 accumulation / stats / residual).
    assert jnp.allclose(out, ref, rtol=2e-2, atol=2e-2), f"max abs diff = {err}"

    print("KERNEL_OK")
</pallas_src>

<mosaic_0001>
module attributes {stable_mosaic.version = 11 : i64} {
  func.func @kernel(%arg0: i32, %arg1: i32, %arg2: memref<1x10x18x128xf32, #tpu.memory_space<vmem>>, %arg3: memref<1x1x128xf32, #tpu.memory_space<vmem>>, %arg4: memref<1x1x128xf32, #tpu.memory_space<vmem>>, %arg5: memref<9x128x128xbf16, #tpu.memory_space<vmem>>, %arg6: memref<1x128xf32, #tpu.memory_space<vmem>>, %arg7: memref<1x256x128xf32, #tpu.memory_space<vmem>>, %arg8: memref<1x128xf32, #tpu.memory_space<vmem>>, %arg9: memref<1x128xf32, #tpu.memory_space<vmem>>, %arg10: memref<256x128xf32, #tpu.memory_space<vmem>>) attributes {dimension_semantics = [#tpu.dimension_semantics<parallel>, #tpu.dimension_semantics<arbitrary>], iteration_bounds = array<i64: 2, 2>, scalar_prefetch = 0 : i64, scratch_operands = 3 : i64, tpu.core_type = #tpu.core_type<tc>, window_params = [{transform_indices = @transform_0, window_bounds = array<i64: 1, 10, 18, 128>}, {transform_indices = @transform_1, window_bounds = array<i64: 1, 1, 128>}, {transform_indices = @transform_2, window_bounds = array<i64: 1, 1, 128>}, {pipeline_mode = #tpu.pipeline_mode<synchronous>, transform_indices = @transform_3, window_bounds = array<i64: 9, 128, 128>}, {pipeline_mode = #tpu.pipeline_mode<synchronous>, transform_indices = @transform_4, window_bounds = array<i64: 1, 128>}, {transform_indices = @transform_5, window_bounds = array<i64: 1, 256, 128>}]} {
    %c0_i32 = arith.constant 0 : i32
    %0 = arith.cmpi eq, %arg1, %c0_i32 : i32
    %1 = arith.extui %0 : i1 to i32
    %c0_i32_0 = arith.constant 0 : i32
    %2 = arith.cmpi ne, %1, %c0_i32_0 : i32
    scf.if %2 {
      %cst_48 = arith.constant 0.000000e+00 : f32
      %88 = vector.broadcast %cst_48 : f32 to vector<1x128xf32>
      %c0_49 = arith.constant 0 : index
      %c0_50 = arith.constant 0 : index
      %89 = vector.load %arg8[%c0_49, %c0_50] : memref<1x128xf32, #tpu.memory_space<vmem>>, vector<1x128xf32>
      tpu.vector_store %arg8[%c0_49, %c0_50], %88 {strides = array<i32>} : memref<1x128xf32, #tpu.memory_space<vmem>>, vector<1x128xf32>,
      %cst_51 = arith.constant 0.000000e+00 : f32
      %90 = vector.broadcast %cst_51 : f32 to vector<1x128xf32>
      %c0_52 = arith.constant 0 : index
      %c0_53 = arith.constant 0 : index
      %91 = vector.load %arg9[%c0_52, %c0_53] : memref<1x128xf32, #tpu.memory_space<vmem>>, vector<1x128xf32>
      tpu.vector_store %arg9[%c0_52, %c0_53], %90 {strides = array<i32>} : memref<1x128xf32, #tpu.memory_space<vmem>>, vector<1x128xf32>,
    } else {
    }
    %c0 = arith.constant 0 : index
    %c0_1 = arith.constant 0 : index
    %c0_2 = arith.constant 0 : index
    %c0_3 = arith.constant 0 : index
    %3 = vector.load %arg2[%c0, %c0_1, %c0_2, %c0_3] : memref<1x10x18x128xf32, #tpu.memory_space<vmem>>, vector<1x10x18x128xf32>
    %4 = vector.shape_cast %3 : vector<1x10x18x128xf32> to vector<10x18x128xf32>
    %5 = arith.truncf %4 : vector<10x18x128xf32> to vector<10x18x128xbf16>
    %c128_i32 = arith.constant 128 : i32
    %6 = arith.muli %arg1, %c128_i32 : i32
    %7 = tpu.assume_multiple %6, 128 : i32
    %8 = vector.extract_strided_slice %4 {offsets = [1, 1, 0], sizes = [8, 16, 128], strides = [1, 1, 1]} : vector<10x18x128xf32> to vector<8x16x128xf32>
    %9 = vector.shape_cast %8 : vector<8x16x128xf32> to vector<128x128xf32>
    %10 = arith.index_cast %7 : i32 to index
    %c0_4 = arith.constant 0 : index
    %11 = vector.load %arg10[%10, %c0_4] : memref<256x128xf32, #tpu.memory_space<vmem>>, vector<128x128xf32>
    tpu.vector_store %arg10[%10, %c0_4], %9 {strides = array<i32>} : memref<256x128xf32, #tpu.memory_space<vmem>>, vector<128x128xf32>,
    %cst = arith.constant 0.000000e+00 : f32
    %12 = vector.broadcast %cst : f32 to vector<128x128xf32>
    %13 = vector.extract_strided_slice %5 {offsets = [0, 0, 0], sizes = [8, 16, 128], strides = [1, 1, 1]} : vector<10x18x128xbf16> to vector<8x16x128xbf16>
    %14 = vector.shape_cast %13 : vector<8x16x128xbf16> to vector<128x128xbf16>
    %c0_5 = arith.constant 0 : index
    %c0_6 = arith.constant 0 : index
    %c0_7 = arith.constant 0 : index
    %15 = vector.load %arg5[%c0_5, %c0_6, %c0_7] : memref<9x128x128xbf16, #tpu.memory_space<vmem>>, vector<1x128x128xbf16>
    %16 = vector.shape_cast %15 : vector<1x128x128xbf16> to vector<128x128xbf16>
    %cst_8 = arith.constant dense<0.000000e+00> : vector<128x128xf32>
    %17 = tpu.matmul %14, %16, %cst_8 {dimension_numbers = #tpu.dot_dimension_numbers<[1], [0], [0], [1], [0, 0, 1, 1], [], []>} : vector<128x128xbf16>, vector<128x128xbf16>, vector<128x128xf32> -> vector<128x128xf32>
    %18 = arith.addf %12, %17 : vector<128x128xf32>
    %19 = vector.extract_strided_slice %5 {offsets = [0, 1, 0], sizes = [8, 16, 128], strides = [1, 1, 1]} : vector<10x18x128xbf16> to vector<8x16x128xbf16>
    %20 = vector.shape_cast %19 : vector<8x16x128xbf16> to vector<128x128xbf16>
    %c1 = arith.constant 1 : index
    %c0_9 = arith.constant 0 : index
    %c0_10 = arith.constant 0 : index
    %21 = vector.load %arg5[%c1, %c0_9, %c0_10] : memref<9x128x128xbf16, #tpu.memory_space<vmem>>, vector<1x128x128xbf16>
    %22 = vector.shape_cast %21 : vector<1x128x128xbf16> to vector<128x128xbf16>
    %cst_11 = arith.constant dense<0.000000e+00> : vector<128x128xf32>
    %23 = tpu.matmul %20, %22, %cst_11 {dimension_numbers = #tpu.dot_dimension_numbers<[1], [0], [0], [1], [0, 0, 1, 1], [], []>} : vector<128x128xbf16>, vector<128x128xbf16>, vector<128x128xf32> -> vector<128x128xf32>
    %24 = arith.addf %18, %23 : vector<128x128xf32>
    %25 = vector.extract_strided_slice %5 {offsets = [0, 2, 0], sizes = [8, 16, 128], strides = [1, 1, 1]} : vector<10x18x128xbf16> to vector<8x16x128xbf16>
    %26 = vector.shape_cast %25 : vector<8x16x128xbf16> to vector<128x128xbf16>
    %c2 = arith.constant 2 : index
    %c0_12 = arith.constant 0 : index
    %c0_13 = arith.constant 0 : index
    %27 = vector.load %arg5[%c2, %c0_12, %c0_13] : memref<9x128x128xbf16, #tpu.memory_space<vmem>>, vector<1x128x128xbf16>
    %28 = vector.shape_cast %27 : vector<1x128x128xbf16> to vector<128x128xbf16>
    %cst_14 = arith.constant dense<0.000000e+00> : vector<128x128xf32>
    %29 = tpu.matmul %26, %28, %cst_14 {dimension_numbers = #tpu.dot_dimension_numbers<[1], [0], [0], [1], [0, 0, 1, 1], [], []>} : vector<128x128xbf16>, vector<128x128xbf16>, vector<128x128xf32> -> vector<128x128xf32>
    %30 = arith.addf %24, %29 : vector<128x128xf32>
    %31 = vector.extract_strided_slice %5 {offsets = [1, 0, 0], sizes = [8, 16, 128], strides = [1, 1, 1]} : vector<10x18x128xbf16> to vector<8x16x128xbf16>
    %32 = vector.shape_cast %31 : vector<8x16x128xbf16> to vector<128x128xbf16>
    %c3 = arith.constant 3 : index
    %c0_15 = arith.constant 0 : index
    %c0_16 = arith.constant 0 : index
    %33 = vector.load %arg5[%c3, %c0_15, %c0_16] : memref<9x128x128xbf16, #tpu.memory_space<vmem>>, vector<1x128x128xbf16>
    %34 = vector.shape_cast %33 : vector<1x128x128xbf16> to vector<128x128xbf16>
    %cst_17 = arith.constant dense<0.000000e+00> : vector<128x128xf32>
    %35 = tpu.matmul %32, %34, %cst_17 {dimension_numbers = #tpu.dot_dimension_numbers<[1], [0], [0], [1], [0, 0, 1, 1], [], []>} : vector<128x128xbf16>, vector<128x128xbf16>, vector<128x128xf32> -> vector<128x128xf32>
    %36 = arith.addf %30, %35 : vector<128x128xf32>
    %37 = vector.extract_strided_slice %5 {offsets = [1, 1, 0], sizes = [8, 16, 128], strides = [1, 1, 1]} : vector<10x18x128xbf16> to vector<8x16x128xbf16>
    %38 = vector.shape_cast %37 : vector<8x16x128xbf16> to vector<128x128xbf16>
    %c4 = arith.constant 4 : index
    %c0_18 = arith.constant 0 : index
    %c0_19 = arith.constant 0 : index
    %39 = vector.load %arg5[%c4, %c0_18, %c0_19] : memref<9x128x128xbf16, #tpu.memory_space<vmem>>, vector<1x128x128xbf16>
    %40 = vector.shape_cast %39 : vector<1x128x128xbf16> to vector<128x128xbf16>
    %cst_20 = arith.constant dense<0.000000e+00> : vector<128x128xf32>
    %41 = tpu.matmul %38, %40, %cst_20 {dimension_numbers = #tpu.dot_dimension_numbers<[1], [0], [0], [1], [0, 0, 1, 1], [], []>} : vector<128x128xbf16>, vector<128x128xbf16>, vector<128x128xf32> -> vector<128x128xf32>
    %42 = arith.addf %36, %41 : vector<128x128xf32>
    %43 = vector.extract_strided_slice %5 {offsets = [1, 2, 0], sizes = [8, 16, 128], strides = [1, 1, 1]} : vector<10x18x128xbf16> to vector<8x16x128xbf16>
    %44 = vector.shape_cast %43 : vector<8x16x128xbf16> to vector<128x128xbf16>
    %c5 = arith.constant 5 : index
    %c0_21 = arith.constant 0 : index
    %c0_22 = arith.constant 0 : index
    %45 = vector.load %arg5[%c5, %c0_21, %c0_22] : memref<9x128x128xbf16, #tpu.memory_space<vmem>>, vector<1x128x128xbf16>
    %46 = vector.shape_cast %45 : vector<1x128x128xbf16> to vector<128x128xbf16>
    %cst_23 = arith.constant dense<0.000000e+00> : vector<128x128xf32>
    %47 = tpu.matmul %44, %46, %cst_23 {dimension_numbers = #tpu.dot_dimension_numbers<[1], [0], [0], [1], [0, 0, 1, 1], [], []>} : vector<128x128xbf16>, vector<128x128xbf16>, vector<128x128xf32> -> vector<128x128xf32>
    %48 = arith.addf %42, %47 : vector<128x128xf32>
    %49 = vector.extract_strided_slice %5 {offsets = [2, 0, 0], sizes = [8, 16, 128], strides = [1, 1, 1]} : vector<10x18x128xbf16> to vector<8x16x128xbf16>
    %50 = vector.shape_cast %49 : vector<8x16x128xbf16> to vector<128x128xbf16>
    %c6 = arith.constant 6 : index
    %c0_24 = arith.constant 0 : index
    %c0_25 = arith.constant 0 : index
    %51 = vector.load %arg5[%c6, %c0_24, %c0_25] : memref<9x128x128xbf16, #tpu.memory_space<vmem>>, vector<1x128x128xbf16>
    %52 = vector.shape_cast %51 : vector<1x128x128xbf16> to vector<128x128xbf16>
    %cst_26 = arith.constant dense<0.000000e+00> : vector<128x128xf32>
    %53 = tpu.matmul %50, %52, %cst_26 {dimension_numbers = #tpu.dot_dimension_numbers<[1], [0], [0], [1], [0, 0, 1, 1], [], []>} : vector<128x128xbf16>, vector<128x128xbf16>, vector<128x128xf32> -> vector<128x128xf32>
    %54 = arith.addf %48, %53 : vector<128x128xf32>
    %55 = vector.extract_strided_slice %5 {offsets = [2, 1, 0], sizes = [8, 16, 128], strides = [1, 1, 1]} : vector<10x18x128xbf16> to vector<8x16x128xbf16>
    %56 = vector.shape_cast %55 : vector<8x16x128xbf16> to vector<128x128xbf16>
    %c7 = arith.constant 7 : index
    %c0_27 = arith.constant 0 : index
    %c0_28 = arith.constant 0 : index
    %57 = vector.load %arg5[%c7, %c0_27, %c0_28] : memref<9x128x128xbf16, #tpu.memory_space<vmem>>, vector<1x128x128xbf16>
    %58 = vector.shape_cast %57 : vector<1x128x128xbf16> to vector<128x128xbf16>
    %cst_29 = arith.constant dense<0.000000e+00> : vector<128x128xf32>
    %59 = tpu.matmul %56, %58, %cst_29 {dimension_numbers = #tpu.dot_dimension_numbers<[1], [0], [0], [1], [0, 0, 1, 1], [], []>} : vector<128x128xbf16>, vector<128x128xbf16>, vector<128x128xf32> -> vector<128x128xf32>
    %60 = arith.addf %54, %59 : vector<128x128xf32>
    %61 = vector.extract_strided_slice %5 {offsets = [2, 2, 0], sizes = [8, 16, 128], strides = [1, 1, 1]} : vector<10x18x128xbf16> to vector<8x16x128xbf16>
    %62 = vector.shape_cast %61 : vector<8x16x128xbf16> to vector<128x128xbf16>
    %c8 = arith.constant 8 : index
    %c0_30 = arith.constant 0 : index
    %c0_31 = arith.constant 0 : index
    %63 = vector.load %arg5[%c8, %c0_30, %c0_31] : memref<9x128x128xbf16, #tpu.memory_space<vmem>>, vector<1x128x128xbf16>
    %64 = vector.shape_cast %63 : vector<1x128x128xbf16> to vector<128x128xbf16>
    %cst_32 = arith.constant dense<0.000000e+00> : vector<128x128xf32>
    %65 = tpu.matmul %62, %64, %cst_32 {dimension_numbers = #tpu.dot_dimension_numbers<[1], [0], [0], [1], [0, 0, 1, 1], [], []>} : vector<128x128xbf16>, vector<128x128xbf16>, vector<128x128xf32> -> vector<128x128xf32>
    %66 = arith.addf %60, %65 : vector<128x128xf32>
    %c0_33 = arith.constant 0 : index
    %c0_34 = arith.constant 0 : index
    %67 = vector.load %arg6[%c0_33, %c0_34] : memref<1x128xf32, #tpu.memory_space<vmem>>, vector<1x128xf32>
    %68 = vector.broadcast %67 : vector<1x128xf32> to vector<128x128xf32>
    %69 = arith.addf %66, %68 : vector<128x128xf32>
    %c0_35 = arith.constant 0 : index
    %c0_36 = arith.constant 0 : index
    %70 = vector.load %arg8[%c0_35, %c0_36] : memref<1x128xf32, #tpu.memory_space<vmem>>, vector<1x128xf32>
    %cst_37 = arith.constant dense<0.000000e+00> : vector<128xf32>
    %71 = vector.multi_reduction <add>, %69, %cst_37 [0] : vector<128x128xf32> to vector<128xf32>
    %72 = vector.shape_cast %71 : vector<128xf32> to vector<1x128xf32>
    %73 = arith.addf %70, %72 : vector<1x128xf32>
    %c0_38 = arith.constant 0 : index
    %c0_39 = arith.constant 0 : index
    %74 = vector.load %arg8[%c0_38, %c0_39] : memref<1x128xf32, #tpu.memory_space<vmem>>, vector<1x128xf32>
    tpu.vector_store %arg8[%c0_38, %c0_39], %73 {strides = array<i32>} : memref<1x128xf32, #tpu.memory_space<vmem>>, vector<1x128xf32>,
    %c0_40 = arith.constant 0 : index
    %c0_41 = arith.constant 0 : index
    %75 = vector.load %arg9[%c0_40, %c0_41] : memref<1x128xf32, #tpu.memory_space<vmem>>, vector<1x128xf32>
    %76 = arith.mulf %69, %69 : vector<128x128xf32>
    %cst_42 = arith.constant dense<0.000000e+00> : vector<128xf32>
    %77 = vector.multi_reduction <add>, %76, %cst_42 [0] : vector<128x128xf32> to vector<128xf32>
    %78 = vector.shape_cast %77 : vector<128xf32> to vector<1x128xf32>
    %79 = arith.addf %75, %78 : vector<1x128xf32>
    %c0_43 = arith.constant 0 : index
    %c0_44 = arith.constant 0 : index
    %80 = vector.load %arg9[%c0_43, %c0_44] : memref<1x128xf32, #tpu.memory_space<vmem>>, vector<1x128xf32>
    tpu.vector_store %arg9[%c0_43, %c0_44], %79 {strides = array<i32>} : memref<1x128xf32, #tpu.memory_space<vmem>>, vector<1x128xf32>,
    %c0_45 = arith.constant 0 : index
    %81 = arith.index_cast %7 : i32 to index
    %c0_46 = arith.constant 0 : index
    %82 = vector.load %arg7[%c0_45, %81, %c0_46] : memref<1x256x128xf32, #tpu.memory_space<vmem>>, vector<1x128x128xf32>
    %83 = vector.shape_cast %82 : vector<1x128x128xf32> to vector<128x128xf32>
    %84 = vector.shape_cast %69 : vector<128x128xf32> to vector<1x128x128xf32>
    tpu.vector_store %arg7[%c0_45, %81, %c0_46], %84 {strides = array<i32>} : memref<1x256x128xf32, #tpu.memory_space<vmem>>, vector<1x128x128xf32>,
    %c1_i32 = arith.constant 1 : i32
    %85 = arith.cmpi eq, %arg1, %c1_i32 : i32
    %86 = arith.extui %85 : i1 to i32
    %c0_i32_47 = arith.constant 0 : i32
    %87 = arith.cmpi ne, %86, %c0_i32_47 : i32
    scf.if %87 {
      %c0_48 = arith.constant 0 : index
      %c0_49 = arith.constant 0 : index
      %88 = vector.load %arg8[%c0_48, %c0_49] : memref<1x128xf32, #tpu.memory_space<vmem>>, vector<1x128xf32>
      %cst_50 = arith.constant 3.906250e-03 : f32
      %89 = vector.broadcast %cst_50 : f32 to vector<1x128xf32>
      %90 = arith.mulf %88, %89 : vector<1x128xf32>
      %c0_51 = arith.constant 0 : index
      %c0_52 = arith.constant 0 : index
      %91 = vector.load %arg9[%c0_51, %c0_52] : memref<1x128xf32, #tpu.memory_space<vmem>>, vector<1x128xf32>
      %cst_53 = arith.constant 3.906250e-03 : f32
      %92 = vector.broadcast %cst_53 : f32 to vector<1x128xf32>
      %93 = arith.mulf %91, %92 : vector<1x128xf32>
      %94 = arith.mulf %90, %90 : vector<1x128xf32>
      %95 = arith.subf %93, %94 : vector<1x128xf32>
      %cst_54 = arith.constant 0.000000e+00 : f32
      %96 = vector.broadcast %cst_54 : f32 to vector<1x128xf32>
      %97 = arith.maximumf %95, %96 : vector<1x128xf32>
      %cst_55 = arith.constant 9.99999974E-6 : f32
      %98 = vector.broadcast %cst_55 : f32 to vector<1x128xf32>
      %99 = arith.addf %97, %98 : vector<1x128xf32>
      %100 = math.rsqrt %99 : vector<1x128xf32>
      %c0_56 = arith.constant 0 : index
      %c0_57 = arith.constant 0 : index
      %c0_58 = arith.constant 0 : index
      %101 = vector.load %arg3[%c0_56, %c0_57, %c0_58] : memref<1x1x128xf32, #tpu.memory_space<vmem>>, vector<1x1x128xf32>
      %102 = vector.shape_cast %101 : vector<1x1x128xf32> to vector<1x128xf32>
      %103 = arith.mulf %102, %100 : vector<1x128xf32>
      %c0_59 = arith.constant 0 : index
      %c0_60 = arith.constant 0 : index
      %c0_61 = arith.constant 0 : index
      %104 = vector.load %arg4[%c0_59, %c0_60, %c0_61] : memref<1x1x128xf32, #tpu.memory_space<vmem>>, vector<1x1x128xf32>
      %105 = vector.shape_cast %104 : vector<1x1x128xf32> to vector<1x128xf32>
      %106 = arith.mulf %90, %103 : vector<1x128xf32>
      %107 = arith.subf %105, %106 : vector<1x128xf32>
      %c0_62 = arith.constant 0 : index
      %c0_63 = arith.constant 0 : index
      %c0_64 = arith.constant 0 : index
      %108 = vector.load %arg7[%c0_62, %c0_63, %c0_64] : memref<1x256x128xf32, #tpu.memory_space<vmem>>, vector<1x256x128xf32>
      %109 = vector.shape_cast %108 : vector<1x256x128xf32> to vector<256x128xf32>
      %110 = vector.broadcast %103 : vector<1x128xf32> to vector<256x128xf32>
      %111 = arith.mulf %109, %110 : vector<256x128xf32>
      %112 = vector.broadcast %107 : vector<1x128xf32> to vector<256x128xf32>
      %113 = arith.addf %111, %112 : vector<256x128xf32>
      %c0_65 = arith.constant 0 : index
      %c0_66 = arith.constant 0 : index
      %114 = vector.load %arg10[%c0_65, %c0_66] : memref<256x128xf32, #tpu.memory_space<vmem>>, vector<256x128xf32>
      %115 = arith.addf %113, %114 : vector<256x128xf32>
      %c0_67 = arith.constant 0 : index
      %c0_68 = arith.constant 0 : index
      %c0_69 = arith.constant 0 : index
      %116 = vector.load %arg7[%c0_67, %c0_68, %c0_69] : memref<1x256x128xf32, #tpu.memory_space<vmem>>, vector<1x256x128xf32>
      %117 = vector.shape_cast %116 : vector<1x256x128xf32> to vector<256x128xf32>
      %118 = vector.shape_cast %115 : vector<256x128xf32> to vector<1x256x128xf32>
      tpu.vector_store %arg7[%c0_67, %c0_68, %c0_69], %118 {strides = array<i32>} : memref<1x256x128xf32, #tpu.memory_space<vmem>>, vector<1x256x128xf32>,
    } else {
    }
    return
  }
  func.func @transform_0(%arg0: i32, %arg1: i32) -> (i32, i32, i32, i32) {
    %c2_i32 = arith.constant 2 : i32
    %0 = arith.muli %arg0, %c2_i32 : i32
    %1 = arith.addi %0, %arg1 : i32
    %c0_i32 = arith.constant 0 : i32
    %c0_i32_0 = arith.constant 0 : i32
    %c0_i32_1 = arith.constant 0 : i32
    %c0_i32_2 = arith.constant 0 : i32
    return %1, %c0_i32, %c0_i32_0, %c0_i32_1 : i32, i32, i32, i32
  }
  func.func @transform_1(%arg0: i32, %arg1: i32) -> (i32, i32, i32) {
    %c0_i32 = arith.constant 0 : i32
    %c0_i32_0 = arith.constant 0 : i32
    %c0_i32_1 = arith.constant 0 : i32
    return %arg0, %c0_i32, %c0_i32_0 : i32, i32, i32
  }
  func.func @transform_2(%arg0: i32, %arg1: i32) -> (i32, i32, i32) {
    %c0_i32 = arith.constant 0 : i32
    %c0_i32_0 = arith.constant 0 : i32
    %c0_i32_1 = arith.constant 0 : i32
    return %arg0, %c0_i32, %c0_i32_0 : i32, i32, i32
  }
  func.func @transform_3(%arg0: i32, %arg1: i32) -> (i32, i32, i32) {
    %c0_i32 = arith.constant 0 : i32
    %c0_i32_0 = arith.constant 0 : i32
    %c0_i32_1 = arith.constant 0 : i32
    %c0_i32_2 = arith.constant 0 : i32
    return %c0_i32, %c0_i32_0, %c0_i32_1 : i32, i32, i32
  }
  func.func @transform_4(%arg0: i32, %arg1: i32) -> (i32, i32) {
    %c0_i32 = arith.constant 0 : i32
    %c0_i32_0 = arith.constant 0 : i32
    %c0_i32_1 = arith.constant 0 : i32
    return %c0_i32, %c0_i32_0 : i32, i32
  }
  func.func @transform_5(%arg0: i32, %arg1: i32) -> (i32, i32, i32) {
    %c0_i32 = arith.constant 0 : i32
    %c0_i32_0 = arith.constant 0 : i32
    %c0_i32_1 = arith.constant 0 : i32
    return %arg0, %c0_i32, %c0_i32_0 : i32, i32, i32
  }
}

</mosaic_0001>

<llo_original>
// kernel: fine_adain_res_blocks.2
$region0: #{fine_adain_res_blocks.2}
  #allocation0 [shape = 'u32[]', space=smem, size = 0x4, offset = 0x4, fixed_abs, tag = 'smem constant byte address 0x4 - core index']
  #allocation1 [shape = 'u32[144,128]{1,0:T(1,128)}', space=vmem, size = 0x12000, scoped, tag = 'internal scratch']
  #allocation2 [shape = 'f32[1,128]{1,0:T(1,128)}', space=vmem, size = 0x200, scoped, tag = 'scratch operand']
  #allocation3 [shape = 'f32[1,128]{1,0:T(1,128)}', space=vmem, size = 0x200, scoped, tag = 'scratch operand']
  #allocation4 [shape = 'f32[256,128]{1,0:T(8,128)}', space=vmem, size = 0x20000, scoped, tag = 'scratch operand']
  %s0 = inlined_call_operand.vmem [shape: f32[4,10,18,128], index: 0, kind: input, shape index: {}]
  %s1 = inlined_call_operand.vmem [shape: f32[2,1,128], index: 1, kind: input, shape index: {}]
  %s2 = inlined_call_operand.vmem [shape: f32[2,1,128], index: 2, kind: input, shape index: {}]
  %s3 = inlined_call_operand.vmem [shape: bf16[9,128,128], index: 3, kind: input, shape index: {}]
  %s4 = inlined_call_operand.vmem [shape: f32[1,128], index: 4, kind: input, shape index: {}]
  %s5 = inlined_call_operand.vmem [shape: f32[2,256,128], index: 5, kind: output, shape index: {}]
  %s6 = sld [smem:[#allocation0]]
  $region61: #{fine_adain_res_blocks.2} parent=0
    _
  %s8 = ssub.s32 1, %s6
  %s9 = scalar_select 0, %s8, %s6
  loop: start=0, step=1, limit=6
  $region2: #{fine_adain_res_blocks.2} parent=0 // loop_pre_header
    _
  $region3: #{fine_adain_res_blocks.2} parent=0 // loop_header
    %s11 = sphi 0, %s15
    %p12 = scmp.ge.s32.totalorder %s11, 6
    %s18 = sphi 0, %s30
    %s19 = sphi 0, %s26
    %s20 = sphi 0, %s18
    %s21 = sphi 0, %s19
    %s22 = sphi 0, %s20
    %s23 = sphi 0, %s21
    %s37 = sphi 0, %s39
    %s40 = sphi 0, %s37
    %s41 = sphi 0, %s40
    %s57 = sphi 0, %s41
    %s63 = sphi 0, %s65
    %s66 = sphi 0, %s63
    %s67 = sphi 0, %s66
    %s83 = sphi 0, %s67
    %s89 = sphi 0, %s91
    %s92 = sphi 0, %s89
    %s93 = sphi 0, %s92
    %s109 = sphi 0, %s93
    %s113 = sphi 0, %s113
    %s115 = sphi 0, %s113
    %s116 = sphi 0, %s115
    %s130 = sphi 0, %s116
    %s134 = sphi 0, %s134
    %s136 = sphi 0, %s134
    %s137 = sphi 0, %s136
    %s151 = sphi 0, %s137
    %s157 = sphi 0, %s159
    %s160 = sphi 0, %s157
    %s161 = sphi 0, %s160
    %s177 = sphi 0, %s161
  $region4: #{fine_adain_res_blocks.2} parent=0 // loop_header_branch
    %14 = sbr.rel (%p12) target = $region8
  $region5: #{fine_adain_res_blocks.2} parent=0 // loop_body
    %s16 = ssub.s32 %s11, 1
    %s17 = ssub.s32 %s11, 2
    %s24 = sadd.s32 1, %s19
    %p25 = scmp.ge.s32.totalorder %s24, 2
    %s26 = scalar_select %p25, 0, %s24
    %s27 = sadd.s32 1, %s18
    %s28 = scalar_select %p25, %s27, %s18
    %p29 = scmp.ge.s32.totalorder %s28, 2
    %s30 = scalar_select %p29, 0, %s28
    %s31 = smul.u32 %s18, 2
    %s32 = sadd.s32 %s31, %s19
    %s33 = smul.u32 %s30, 2
    %s34 = sadd.s32 %s33, %s26
    %s35 = ssub.s32 %s32, %s34
    %p36 = scmp.eq.s32.totalorder %s35, 0
    %s38 = sadd.s32 %s37, 1
    %s39 = scalar_select %p36, %s37, %s38
    %p42 = pneg %p36
    %p43 = scmp.eq.s32.totalorder %s11, 3
    %p44 = por %p42, %p43
    %p45 = scmp.ne.s32.totalorder %s37, %s40
    %p46 = scmp.eq.s32.totalorder %s11, 0
    %p47 = por %p45, %p46
    %p48 = scmp.ne.s32.totalorder %s37, %s40
    %p49 = scmp.eq.s32.totalorder %s16, 3
    %p50 = por %p48, %p49
    %p51 = scmp.ne.s32.totalorder %s40, %s41
    %p52 = scmp.eq.s32.totalorder %s16, 0
    %p53 = por %p51, %p52
    %p54 = scmp.ne.s32.totalorder %s40, %s41
    %p55 = scmp.eq.s32.totalorder %s17, 3
    %p56 = por %p54, %p55
    %p58 = scmp.ne.s32.totalorder %s41, %s57
    %p59 = scmp.eq.s32.totalorder %s17, 0
    %p60 = por %p58, %p59
    %s61 = ssub.s32 %s18, %s30
    %p62 = scmp.eq.s32.totalorder %s61, 0
    %s64 = sadd.s32 %s63, 1
    %s65 = scalar_select %p62, %s63, %s64
    %p68 = pneg %p62
    %p69 = scmp.eq.s32.totalorder %s11, 3
    %p70 = por %p68, %p69
    %p71 = scmp.ne.s32.totalorder %s63, %s66
    %p72 = scmp.eq.s32.totalorder %s11, 0
    %p73 = por %p71, %p72
    %p74 = scmp.ne.s32.totalorder %s63, %s66
    %p75 = scmp.eq.s32.totalorder %s16, 3
    %p76 = por %p74, %p75
    %p77 = scmp.ne.s32.totalorder %s66, %s67
    %p78 = scmp.eq.s32.totalorder %s16, 0
    %p79 = por %p77, %p78
    %p80 = scmp.ne.s32.totalorder %s66, %s67
    %p81 = scmp.eq.s32.totalorder %s17, 3
    %p82 = por %p80, %p81
    %p84 = scmp.ne.s32.totalorder %s67, %s83
    %p85 = scmp.eq.s32.totalorder %s17, 0
    %p86 = por %p84, %p85
    %s87 = ssub.s32 %s18, %s30
    %p88 = scmp.eq.s32.totalorder %s87, 0
    %s90 = sadd.s32 %s89, 1
    %s91 = scalar_select %p88, %s89, %s90
    %p94 = pneg %p88
    %p95 = scmp.eq.s32.totalorder %s11, 3
    %p96 = por %p94, %p95
    %p97 = scmp.ne.s32.totalorder %s89, %s92
    %p98 = scmp.eq.s32.totalorder %s11, 0
    %p99 = por %p97, %p98
    %p100 = scmp.ne.s32.totalorder %s89, %s92
    %p101 = scmp.eq.s32.totalorder %s16, 3
    %p102 = por %p100, %p101
    %p103 = scmp.ne.s32.totalorder %s92, %s93
    %p104 = scmp.eq.s32.totalorder %s16, 0
    %p105 = por %p103, %p104
    %p106 = scmp.ne.s32.totalorder %s92, %s93
    %p107 = scmp.eq.s32.totalorder %s17, 3
    %p108 = por %p106, %p107
    %p110 = scmp.ne.s32.totalorder %s93, %s109
    %p111 = scmp.eq.s32.totalorder %s17, 0
    %p112 = por %p110, %p111
    %s114 = sadd.s32 %s113, 1
    %p117 = scmp.eq.s32.totalorder %s11, 3
    %p118 = scmp.ne.s32.totalorder %s113, %s115
    %p119 = scmp.eq.s32.totalorder %s11, 0
    %p120 = por %p118, %p119
    %p121 = scmp.ne.s32.totalorder %s113, %s115
    %p122 = scmp.eq.s32.totalorder %s16, 3
    %p123 = por %p121, %p122
    %p124 = scmp.ne.s32.totalorder %s115, %s116
    %p125 = scmp.eq.s32.totalorder %s16, 0
    %p126 = por %p124, %p125
    %p127 = scmp.ne.s32.totalorder %s115, %s116
    %p128 = scmp.eq.s32.totalorder %s17, 3
    %p129 = por %p127, %p128
    %p131 = scmp.ne.s32.totalorder %s116, %s130
    %p132 = scmp.eq.s32.totalorder %s17, 0
    %p133 = por %p131, %p132
    %s135 = sadd.s32 %s134, 1
    %p138 = scmp.eq.s32.totalorder %s11, 3
    %p139 = scmp.ne.s32.totalorder %s134, %s136
    %p140 = scmp.eq.s32.totalorder %s11, 0
    %p141 = por %p139, %p140
    %p142 = scmp.ne.s32.totalorder %s134, %s136
    %p143 = scmp.eq.s32.totalorder %s16, 3
    %p144 = por %p142, %p143
    %p145 = scmp.ne.s32.totalorder %s136, %s137
    %p146 = scmp.eq.s32.totalorder %s16, 0
    %p147 = por %p145, %p146
    %p148 = scmp.ne.s32.totalorder %s136, %s137
    %p149 = scmp.eq.s32.totalorder %s17, 3
    %p150 = por %p148, %p149
    %p152 = scmp.ne.s32.totalorder %s137, %s151
    %p153 = scmp.eq.s32.totalorder %s17, 0
    %p154 = por %p152, %p153
    %s155 = ssub.s32 %s18, %s30
    %p156 = scmp.eq.s32.totalorder %s155, 0
    %s158 = sadd.s32 %s157, 1
    %s159 = scalar_select %p156, %s157, %s158
    %p162 = pneg %p156
    %p163 = scmp.eq.s32.totalorder %s11, 3
    %p164 = por %p162, %p163
    %p165 = scmp.ne.s32.totalorder %s157, %s160
    %p166 = scmp.eq.s32.totalorder %s11, 0
    %p167 = por %p165, %p166
    %p168 = scmp.ne.s32.totalorder %s157, %s160
    %p169 = scmp.eq.s32.totalorder %s16, 3
    %p170 = por %p168, %p169
    %p171 = scmp.ne.s32.totalorder %s160, %s161
    %p172 = scmp.eq.s32.totalorder %s16, 0
    %p173 = por %p171, %p172
    %p174 = scmp.ne.s32.totalorder %s160, %s161
    %p175 = scmp.eq.s32.totalorder %s17, 3
    %p176 = por %p174, %p175
    %p178 = scmp.ne.s32.totalorder %s161, %s177
    %p179 = scmp.eq.s32.totalorder %s17, 0
    %p180 = por %p178, %p179
    %p181 = scmp.le.s32.totalorder 1, %s11
    %p182 = scmp.lt.s32.totalorder %s11, 5
    %p183 = pnand %p181, %p182
    %p184 = pneg %p183
    // Predicated region
    $region9: #{fine_adain_res_blocks.2} parent=5 // pred_check
      _
    $region10: #{fine_adain_res_blocks.2} parent=5 // pred_check_branch
      %186 = sbr.rel (%p183) target = $region12
    $region11: #{fine_adain_res_blocks.2} parent=5 // pred_region
      %s187 = ssub.s32 %s11, 1
      // Predicated region
      $region13: #{fine_adain_res_blocks.2} parent=11 // pred_check
        %p188 = pneg %p126
      $region14: #{fine_adain_res_blocks.2} parent=11 // pred_check_branch
        %190 = sbr.rel (%p188) target = $region16
      $region15: #{fine_adain_res_blocks.2} parent=11 // pred_region
        _
      $region16: #{fine_adain_res_blocks.2} parent=11 // pred_fallthru
        _
      // Predicated region
      $region17: #{fine_adain_res_blocks.2} parent=11 // pred_check
        %p191 = pneg %p147
      $region18: #{fine_adain_res_blocks.2} parent=11 // pred_check_branch
        %193 = sbr.rel (%p191) target = $region20
      $region19: #{fine_adain_res_blocks.2} parent=11 // pred_region
        _
      $region20: #{fine_adain_res_blocks.2} parent=11 // pred_fallthru
        _
    $region12: #{fine_adain_res_blocks.2} parent=5 // pred_fallthru
      _
    %p194 = scmp.lt.s32.totalorder %s11, 4
    // Predicated region
    $region21: #{fine_adain_res_blocks.2} parent=5 // pred_check
      %p195 = pneg %p194
    $region22: #{fine_adain_res_blocks.2} parent=5 // pred_check_branch
      %197 = sbr.rel (%p195) target = $region24
    $region23: #{fine_adain_res_blocks.2} parent=5 // pred_region
      // Predicated region
      $region25: #{fine_adain_res_blocks.2} parent=23 // pred_check
        %p198 = pneg %p47
      $region26: #{fine_adain_res_blocks.2} parent=23 // pred_check_branch
        %200 = sbr.rel (%p198) target = $region28
      $region27: #{fine_adain_res_blocks.2} parent=23 // pred_region
        %s201 = smul.u32 %s18, 2
        %s202 = sadd.s32 %s201, %s19
        %p203 = scmp.lt.s32.totalorder %s202, 3
        %s204 = scalar_select %p203, %s202, 3
        %s205 = smul.addr %s204, 30
        %s206 = smul.addr %s205, 8
        %s207 = scalar_lea.vmem %s0, %s206
        %s208 = smul.u32 %s18, 2
        %s209 = sadd.s32 %s208, %s19
      $region28: #{fine_adain_res_blocks.2} parent=23 // pred_fallthru
        _
      // Predicated region
      $region29: #{fine_adain_res_blocks.2} parent=23 // pred_check
        %p210 = pneg %p73
      $region30: #{fine_adain_res_blocks.2} parent=23 // pred_check_branch
        %212 = sbr.rel (%p210) target = $region32
      $region31: #{fine_adain_res_blocks.2} parent=23 // pred_region
        %p213 = scmp.lt.s32.totalorder %s18, 1
        %s214 = scalar_select %p213, %s18, 1
        %s215 = scalar_lea.vmem %s1, %s214
      $region32: #{fine_adain_res_blocks.2} parent=23 // pred_fallthru
        _
      // Predicated region
      $region33: #{fine_adain_res_blocks.2} parent=23 // pred_check
        %p216 = pneg %p99
      $region34: #{fine_adain_res_blocks.2} parent=23 // pred_check_branch
        %218 = sbr.rel (%p216) target = $region36
      $region35: #{fine_adain_res_blocks.2} parent=23 // pred_region
        %p219 = scmp.lt.s32.totalorder %s18, 1
        %s220 = scalar_select %p219, %s18, 1
        %s221 = scalar_lea.vmem %s2, %s220
      $region36: #{fine_adain_res_blocks.2} parent=23 // pred_fallthru
        _
    $region24: #{fine_adain_res_blocks.2} parent=5 // pred_fallthru
      _
    %p222 = scmp.le.s32.totalorder 1, %s11
    %p223 = scmp.lt.s32.totalorder %s11, 5
    %p224 = pnand %p222, %p223
    %p225 = pneg %p224
    // Predicated region
    $region37: #{fine_adain_res_blocks.2} parent=5 // pred_check
      _
    $region38: #{fine_adain_res_blocks.2} parent=5 // pred_check_branch
      %227 = sbr.rel (%p224) target = $region40
    $region39: #{fine_adain_res_blocks.2} parent=5 // pred_region
      %s228 = ssub.s32 %s11, 1
      %s229 = smul.u32 %s20, 2
      %s230 = sadd.s32 %s229, %s21
      %p231 = scmp.lt.s32.totalorder %s230, 3
      %s232 = scalar_select %p231, %s230, 3
      %s233 = smul.addr %s232, 30
      %s234 = smul.addr %s233, 8
      %s235 = scalar_lea.vmem %s0, %s234
      %p236 = pneg %p53
      %p237 = pneg %p50
      %p238 = scmp.lt.s32.totalorder %s20, 1
      %s239 = scalar_select %p238, %s20, 1
      %s240 = scalar_lea.vmem %s1, %s239
      %p241 = pneg %p79
      %p242 = pneg %p76
      %p243 = scmp.lt.s32.totalorder %s20, 1
      %s244 = scalar_select %p243, %s20, 1
      %s245 = scalar_lea.vmem %s2, %s244
      %p246 = pneg %p105
      %p247 = pneg %p102
      %p248 = pneg %p126
      %p249 = pneg %p123
      %p250 = pneg %p147
      %p251 = pneg %p144
      %p252 = pneg %p173
      %p253 = pneg %p170
      %p254 = scmp.lt.s32.totalorder %s20, 1
      %s255 = scalar_select %p254, %s20, 1
      %s256 = smul.addr %s255, 32
      %s257 = smul.addr %s256, 8
      %s258 = scalar_lea.vmem %s5, %s257
      %s259 = smul.u32 %s20, 2
      %s260 = sadd.s32 %s259, %s21
      %p261 = scmp.lt.s32.totalorder %s260, 3
      %s262 = scalar_select %p261, %s260, 3
      %s263 = smul.addr %s262, 30
      %s264 = smul.addr %s263, 8
      %s265 = scalar_lea.vmem %s0, %s264
      %s266 = smul.u32 %s20, 2
      %s267 = sadd.s32 %s266, %s21
      %p268 = scmp.lt.s32.totalorder %s20, 1
      %s269 = scalar_select %p268, %s20, 1
      %s270 = scalar_lea.vmem %s1, %s269
      %p271 = scmp.lt.s32.totalorder %s20, 1
      %s272 = scalar_select %p271, %s20, 1
      %s273 = scalar_lea.vmem %s2, %s272
      %p274 = scmp.lt.s32.totalorder %s20, 1
      %s275 = scalar_select %p274, %s20, 1
      %s276 = smul.addr %s275, 32
      %s277 = smul.addr %s276, 8
      %s278 = scalar_lea.vmem %s5, %s277
      %p280 = scmp.eq.s32.totalorder %s21, 0
      // Predicated region
      $region41: #{fine_adain_res_blocks.2} parent=39 // pred_check
        %p281 = pneg %p280
      $region42: #{fine_adain_res_blocks.2} parent=39 // pred_check_branch
        %283 = sbr.rel (%p281) target = $region44
      $region43: #{fine_adain_res_blocks.2} parent=39 // pred_region
        %284 = vst [vmem:[#allocation2] sm:$0x1] 0.0
        %285 = vst [vmem:[#allocation3] sm:$0x1] 0.0
      $region44: #{fine_adain_res_blocks.2} parent=39 // pred_fallthru
        _
      %v286 = vld [vmem:[%s265] sm:$0xff]
      %v287 = vld [vmem:[%s265 + $0x8] sm:$0xff]
      %v288 = vld [vmem:[%s265 + $0x10] sm:$0x3]
      %v289 = vld [vmem:[%s265 + $0x18] sm:$0xff]
      %v290 = vld [vmem:[%s265 + $0x20] sm:$0xff]
      %v291 = vld [vmem:[%s265 + $0x28] sm:$0x3]
      %v292 = vld [vmem:[%s265 + $0x30] sm:$0xff]
      %v293 = vld [vmem:[%s265 + $0x38] sm:$0xff]
      %v294 = vld [vmem:[%s265 + $0x40] sm:$0x3]
      %v295 = vld [vmem:[%s265 + $0x48] sm:$0xff]
      %v296 = vld [vmem:[%s265 + $0x50] sm:$0xff]
      %v297 = vld [vmem:[%s265 + $0x58] sm:$0x3]
      %v298 = vld [vmem:[%s265 + $0x60] sm:$0xff]
      %v299 = vld [vmem:[%s265 + $0x68] sm:$0xff]
      %v300 = vld [vmem:[%s265 + $0x70] sm:$0x3]
      %v301 = vld [vmem:[%s265 + $0x78] sm:$0xff]
      %v302 = vld [vmem:[%s265 + $0x80] sm:$0xff]
      %v303 = vld [vmem:[%s265 + $0x88] sm:$0x3]
      %v304 = vld [vmem:[%s265 + $0x90] sm:$0xff]
      %v305 = vld [vmem:[%s265 + $0x98] sm:$0xff]
      %v306 = vld [vmem:[%s265 + $0xa0] sm:$0x3]
      %v307 = vld [vmem:[%s265 + $0xa8] sm:$0xff]
      %v308 = vld [vmem:[%s265 + $0xb0] sm:$0xff]
      %v309 = vld [vmem:[%s265 + $0xb8] sm:$0x3]
      %v310 = vld [vmem:[%s265 + $0xc0] sm:$0xff]
      %v311 = vld [vmem:[%s265 + $0xc8] sm:$0xff]
      %v312 = vld [vmem:[%s265 + $0xd0] sm:$0x3]
      %v313 = vld [vmem:[%s265 + $0xd8] sm:$0xff]
      %v314 = vld [vmem:[%s265 + $0xe0] sm:$0xff]
      %v315 = vld [vmem:[%s265 + $0xe8] sm:$0x3]
      %v316 = vpack.c.bf16 %v287, %v286
      %v317 = vpack.c.bf16 %v288, %v288
      %v318 = vpack.c.bf16 %v290, %v289
      %v319 = vpack.c.bf16 %v291, %v291
      %v320 = vpack.c.bf16 %v293, %v292
      %v321 = vpack.c.bf16 %v294, %v294
      %v322 = vpack.c.bf16 %v296, %v295
      %v323 = vpack.c.bf16 %v297, %v297
      %v324 = vpack.c.bf16 %v299, %v298
      %v325 = vpack.c.bf16 %v300, %v300
      %v326 = vpack.c.bf16 %v302, %v301
      %v327 = vpack.c.bf16 %v303, %v303
      %v328 = vpack.c.bf16 %v305, %v304
      %v329 = vpack.c.bf16 %v306, %v306
      %v330 = vpack.c.bf16 %v308, %v307
      %v331 = vpack.c.bf16 %v309, %v309
      %v332 = vpack.c.bf16 %v311, %v310
      %v333 = vpack.c.bf16 %v312, %v312
      %v334 = vpack.c.bf16 %v314, %v313
      %v335 = vpack.c.bf16 %v315, %v315
      %s336 = smul.u32 %s21, 128
      %vm361 = vcmask 1046528
      %v362 = vrot.slane %v289, 1
      %v363 = vrot.slane %v290, 1
      %v364 = vsel %vm361, %v362, %v363
      %v365 = vrot.slane %v291, 1
      %v366 = vsel %vm361, %v363, %v365
      %v367 = vrot.slane %v292, 1
      %v368 = vrot.slane %v293, 1
      %v369 = vsel %vm361, %v367, %v368
      %v370 = vrot.slane %v294, 1
      %v371 = vsel %vm361, %v368, %v370
      %v372 = vrot.slane %v295, 1
      %v373 = vrot.slane %v296, 1
      %v374 = vsel %vm361, %v372, %v373
      %v375 = vrot.slane %v297, 1
      %v376 = vsel %vm361, %v373, %v375
      %v377 = vrot.slane %v298, 1
      %v378 = vrot.slane %v299, 1
      %v379 = vsel %vm361, %v377, %v378
      %v380 = vrot.slane %v300, 1
      %v381 = vsel %vm361, %v378, %v380
      %v382 = vrot.slane %v301, 1
      %v383 = vrot.slane %v302, 1
      %v384 = vsel %vm361, %v382, %v383
      %v385 = vrot.slane %v303, 1
      %v386 = vsel %vm361, %v383, %v385
      %v387 = vrot.slane %v304, 1
      %v388 = vrot.slane %v305, 1
      %v389 = vsel %vm361, %v387, %v388
      %v390 = vrot.slane %v306, 1
      %v391 = vsel %vm361, %v388, %v390
      %v392 = vrot.slane %v307, 1
      %v393 = vrot.slane %v308, 1
      %v394 = vsel %vm361, %v392, %v393
      %v395 = vrot.slane %v309, 1
      %v396 = vsel %vm361, %v393, %v395
      %v397 = vrot.slane %v310, 1
      %v398 = vrot.slane %v311, 1
      %v399 = vsel %vm361, %v397, %v398
      %v400 = vrot.slane %v312, 1
      %v401 = vsel %vm361, %v398, %v400
      %s418 = scalar_lea.vmem [#allocation4], %s336
      %419 = vst [vmem:[%s418] sm:$0xff] %v364
      %420 = vst [vmem:[%s418 + $0x8] sm:$0xff] %v366
      %421 = vst [vmem:[%s418 + $0x10] sm:$0xff] %v369
      %422 = vst [vmem:[%s418 + $0x18] sm:$0xff] %v371
      %423 = vst [vmem:[%s418 + $0x20] sm:$0xff] %v374
      %424 = vst [vmem:[%s418 + $0x28] sm:$0xff] %v376
      %425 = vst [vmem:[%s418 + $0x30] sm:$0xff] %v379
      %426 = vst [vmem:[%s418 + $0x38] sm:$0xff] %v381
      %427 = vst [vmem:[%s418 + $0x40] sm:$0xff] %v384
      %428 = vst [vmem:[%s418 + $0x48] sm:$0xff] %v386
      %429 = vst [vmem:[%s418 + $0x50] sm:$0xff] %v389
      %430 = vst [vmem:[%s418 + $0x58] sm:$0xff] %v391
      %431 = vst [vmem:[%s418 + $0x60] sm:$0xff] %v394
      %432 = vst [vmem:[%s418 + $0x68] sm:$0xff] %v396
      %433 = vst [vmem:[%s418 + $0x70] sm:$0xff] %v399
      %434 = vst [vmem:[%s418 + $0x78] sm:$0xff] %v401
      %v435 = vld [vmem:[%s3] sm:$0xf]
      %v436 = vld [vmem:[%s3 + $0x4] sm:$0xf]
      %v437 = vld [vmem:[%s3 + $0x8] sm:$0xf]
      %v438 = vld [vmem:[%s3 + $0xc] sm:$0xf]
      %v439 = vld [vmem:[%s3 + $0x10] sm:$0xf]
      %v440 = vld [vmem:[%s3 + $0x14] sm:$0xf]
      %v441 = vld [vmem:[%s3 + $0x18] sm:$0xf]
      %v442 = vld [vmem:[%s3 + $0x1c] sm:$0xf]
      %v443 = vld [vmem:[%s3 + $0x20] sm:$0xf]
      %v444 = vld [vmem:[%s3 + $0x24] sm:$0xf]
      %v445 = vld [vmem:[%s3 + $0x28] sm:$0xf]
      %v446 = vld [vmem:[%s3 + $0x2c] sm:$0xf]
      %v447 = vld [vmem:[%s3 + $0x30] sm:$0xf]
      %v448 = vld [vmem:[%s3 + $0x34] sm:$0xf]
      %v449 = vld [vmem:[%s3 + $0x38] sm:$0xf]
      %v450 = vld [vmem:[%s3 + $0x3c] sm:$0xf]
      %vm451 = vsmask.f32 7424
      %v453 = vshrl.u32 %v316, 16
      %v455 = vshll.u32 %v316, 16
      %v457 = vrot.slane %v455, 1
      %v458 = vor.u32 %v453, %v457
      %v460 = vshll.u32 %v317, 16
      %v462 = vrot.slane %v460, 1
      %v463 = vsel %vm451, %v458, %v462
      %v465 = vshrl.u32 %v318, 16
      %v467 = vshll.u32 %v318, 16
      %v469 = vrot.slane %v467, 1
      %v470 = vor.u32 %v465, %v469
      %v472 = vshll.u32 %v319, 16
      %v474 = vrot.slane %v472, 1
      %v475 = vsel %vm451, %v470, %v474
      %v477 = vshrl.u32 %v320, 16
      %v479 = vshll.u32 %v320, 16
      %v481 = vrot.slane %v479, 1
      %v482 = vor.u32 %v477, %v481
      %v484 = vshll.u32 %v321, 16
      %v486 = vrot.slane %v484, 1
      %v487 = vsel %vm451, %v482, %v486
      %v489 = vshrl.u32 %v322, 16
      %v491 = vshll.u32 %v322, 16
      %v493 = vrot.slane %v491, 1
      %v494 = vor.u32 %v489, %v493
      %v496 = vshll.u32 %v323, 16
      %v498 = vrot.slane %v496, 1
      %v499 = vsel %vm451, %v494, %v498
      %v501 = vshrl.u32 %v324, 16
      %v503 = vshll.u32 %v324, 16
      %v505 = vrot.slane %v503, 1
      %v506 = vor.u32 %v501, %v505
      %v508 = vshll.u32 %v325, 16
      %v510 = vrot.slane %v508, 1
      %v511 = vsel %vm451, %v506, %v510
      %v513 = vshrl.u32 %v326, 16
      %v515 = vshll.u32 %v326, 16
      %v517 = vrot.slane %v515, 1
      %v518 = vor.u32 %v513, %v517
      %v520 = vshll.u32 %v327, 16
      %v522 = vrot.slane %v520, 1
      %v523 = vsel %vm451, %v518, %v522
      %v525 = vshrl.u32 %v328, 16
      %v527 = vshll.u32 %v328, 16
      %v529 = vrot.slane %v527, 1
      %v530 = vor.u32 %v525, %v529
      %v532 = vshll.u32 %v329, 16
      %v534 = vrot.slane %v532, 1
      %v535 = vsel %vm451, %v530, %v534
      %v537 = vshrl.u32 %v330, 16
      %v539 = vshll.u32 %v330, 16
      %v541 = vrot.slane %v539, 1
      %v542 = vor.u32 %v537, %v541
      %v544 = vshll.u32 %v331, 16
      %v546 = vrot.slane %v544, 1
      %v547 = vsel %vm451, %v542, %v546
      %s556 = scalar_lea.vmem %s3, 64
      %v557 = vld [vmem:[%s556] sm:$0xf]
      %v558 = vld [vmem:[%s556 + $0x4] sm:$0xf]
      %v559 = vld [vmem:[%s556 + $0x8] sm:$0xf]
      %v560 = vld [vmem:[%s556 + $0xc] sm:$0xf]
      %v561 = vld [vmem:[%s556 + $0x10] sm:$0xf]
      %v562 = vld [vmem:[%s556 + $0x14] sm:$0xf]
      %v563 = vld [vmem:[%s556 + $0x18] sm:$0xf]
      %v564 = vld [vmem:[%s556 + $0x1c] sm:$0xf]
      %v565 = vld [vmem:[%s556 + $0x20] sm:$0xf]
      %v566 = vld [vmem:[%s556 + $0x24] sm:$0xf]
      %v567 = vld [vmem:[%s556 + $0x28] sm:$0xf]
      %v568 = vld [vmem:[%s556 + $0x2c] sm:$0xf]
      %v569 = vld [vmem:[%s556 + $0x30] sm:$0xf]
      %v570 = vld [vmem:[%s556 + $0x34] sm:$0xf]
      %v571 = vld [vmem:[%s556 + $0x38] sm:$0xf]
      %v572 = vld [vmem:[%s556 + $0x3c] sm:$0xf]
      %v589 = vunpack.c.l.b16 %v557
      %v590 = vunpack.c.l.b16 %v558
      %v591 = vunpack.c.l.b16 %v559
      %v592 = vunpack.c.l.b16 %v560
      %v593 = vunpack.c.l.b16 %v561
      %v594 = vunpack.c.l.b16 %v562
      %v595 = vunpack.c.l.b16 %v563
      %v596 = vunpack.c.l.b16 %v564
      %v597 = vunpack.c.l.b16 %v565
      %v598 = vunpack.c.l.b16 %v566
      %v599 = vunpack.c.l.b16 %v567
      %v600 = vunpack.c.l.b16 %v568
      %v601 = vunpack.c.l.b16 %v569
      %v602 = vunpack.c.l.b16 %v570
      %v603 = vunpack.c.l.b16 %v571
      %v604 = vunpack.c.l.b16 %v572
      %v605 = vpack.c.b16 %v590, %v589
      %v606 = vpack.c.b16 %v592, %v591
      %v607 = vpack.c.b16 %v594, %v593
      %v608 = vpack.c.b16 %v596, %v595
      %v609 = vpack.c.b16 %v598, %v597
      %v610 = vpack.c.b16 %v600, %v599
      %v611 = vpack.c.b16 %v602, %v601
      %v612 = vpack.c.b16 %v604, %v603
      %621 = vmatprep.subr.bf16.mxu0 0
      %622 = vmatpush1.bf16.msra.mxu0 %v605
      %623 = vmatprep.subr.bf16.mxu0 0
      %624 = vmatpush1.bf16.msra.mxu0 %v606
      %625 = vmatprep.subr.bf16.mxu0 0
      %626 = vmatpush1.bf16.msra.mxu0 %v607
      %627 = vmatprep.subr.bf16.mxu0 0
      %628 = vmatpush1.bf16.msra.mxu0 %v608
      %629 = vmatprep.subr.bf16.mxu0 0
      %630 = vmatpush1.bf16.msra.mxu0 %v609
      %631 = vmatprep.subr.bf16.mxu0 0
      %632 = vmatpush1.bf16.msra.mxu0 %v610
      %633 = vmatprep.subr.bf16.mxu0 0
      %634 = vmatpush1.bf16.msra.mxu0 %v611
      %635 = vmatprep.subr.bf16.mxu0 0
      %636 = vmatpush1.bf16.msra.mxu0 %v612
      %637 = vmatprep.subr.bf16.mxu0 0
      %638 = vmatpush1.bf16.msra.mxu0 0
      %639 = vmatprep.subr.bf16.mxu0 0
      %640 = vmatpush1.bf16.msra.mxu0 0
      %641 = vmatprep.subr.bf16.mxu0 0
      %642 = vmatpush1.bf16.msra.mxu0 0
      %643 = vmatprep.subr.bf16.mxu0 0
      %644 = vmatpush1.bf16.msra.mxu0 0
      %645 = vmatprep.subr.bf16.mxu0 0
      %646 = vmatpush1.bf16.msra.mxu0 0
      %647 = vmatprep.subr.bf16.mxu0 0
      %648 = vmatpush1.bf16.msra.mxu0 0
      %649 = vmatprep.subr.bf16.mxu0 0
      %650 = vmatpush1.bf16.msra.mxu0 0
      %651 = vmatprep.subr.bf16.mxu0 0
      %652 = vmatpush1.bf16.msra.mxu0 0
      %653 = vmatprep.mubr.bf16.mxu0 0
      %654 = vmatmul.mubr.bf16.gmra.mrb[0].mxu0 %v463
      %v655 = vpop.f32.mrb[0].mxu0
      %v656 = vadd.f32 0.0, %v655
      %v657 = vpop.f32.mrb[0].mxu0
      %v658 = vpop.f32.mrb[0].mxu0
      %v659 = vadd.f32 0.0, %v658
      %v660 = vpop.f32.mrb[0].mxu0
      %661 = vmatprep.mubr.bf16.mxu0 0
      %662 = vmatmul.mubr.bf16.gmra.mrb[0].mxu0 %v475
      %v663 = vpop.f32.mrb[0].mxu0
      %v664 = vadd.f32 0.0, %v663
      %v665 = vpop.f32.mrb[0].mxu0
      %v666 = vpop.f32.mrb[0].mxu0
      %v667 = vadd.f32 0.0, %v666
      %v668 = vpop.f32.mrb[0].mxu0
      %669 = vmatprep.mubr.bf16.mxu0 0
      %670 = vmatmul.mubr.bf16.gmra.mrb[0].mxu0 %v487
      %v671 = vpop.f32.mrb[0].mxu0
      %v672 = vadd.f32 0.0, %v671
      %v673 = vpop.f32.mrb[0].mxu0
      %v674 = vpop.f32.mrb[0].mxu0
      %v675 = vadd.f32 0.0, %v674
      %v676 = vpop.f32.mrb[0].mxu0
      %677 = vmatprep.mubr.bf16.mxu0 0
      %678 = vmatmul.mubr.bf16.gmra.mrb[0].mxu0 %v499
      %v679 = vpop.f32.mrb[0].mxu0
      %v680 = vadd.f32 0.0, %v679
      %v681 = vpop.f32.mrb[0].mxu0
      %v682 = vpop.f32.mrb[0].mxu0
      %v683 = vadd.f32 0.0, %v682
      %v684 = vpop.f32.mrb[0].mxu0
      %685 = vmatprep.mubr.bf16.mxu0 0
      %686 = vmatmul.mubr.bf16.gmra.mrb[0].mxu0 %v511
      %v687 = vpop.f32.mrb[0].mxu0
      %v688 = vadd.f32 0.0, %v687
      %v689 = vpop.f32.mrb[0].mxu0
      %v690 = vpop.f32.mrb[0].mxu0
      %v691 = vadd.f32 0.0, %v690
      %v692 = vpop.f32.mrb[0].mxu0
      %693 = vmatprep.mubr.bf16.mxu0 0
      %694 = vmatmul.mubr.bf16.gmra.mrb[0].mxu0 %v523
      %v695 = vpop.f32.mrb[0].mxu0
      %v696 = vadd.f32 0.0, %v695
      %v697 = vpop.f32.mrb[0].mxu0
      %v698 = vpop.f32.mrb[0].mxu0
      %v699 = vadd.f32 0.0, %v698
      %v700 = vpop.f32.mrb[0].mxu0
      %701 = vmatprep.mubr.bf16.mxu0 0
      %702 = vmatmul.mubr.bf16.gmra.mrb[0].mxu0 %v535
      %v703 = vpop.f32.mrb[0].mxu0
      %v704 = vadd.f32 0.0, %v703
      %v705 = vpop.f32.mrb[0].mxu0
      %v706 = vpop.f32.mrb[0].mxu0
      %v707 = vadd.f32 0.0, %v706
      %v708 = vpop.f32.mrb[0].mxu0
      %709 = vmatprep.mubr.bf16.mxu0 0
      %710 = vmatmul.mubr.bf16.gmra.mrb[0].mxu0 %v547
      %v711 = vpop.f32.mrb[0].mxu0
      %v712 = vadd.f32 0.0, %v711
      %v713 = vpop.f32.mrb[0].mxu0
      %v714 = vpop.f32.mrb[0].mxu0
      %v715 = vadd.f32 0.0, %v714
      %v716 = vpop.f32.mrb[0].mxu0
      %717 = vdwg.mxu0
      %v734 = vunpack.c.l.b16 %v435
      %v735 = vunpack.c.l.b16 %v436
      %v736 = vunpack.c.l.b16 %v437
      %v737 = vunpack.c.l.b16 %v438
      %v738 = vunpack.c.l.b16 %v439
      %v739 = vunpack.c.l.b16 %v440
      %v740 = vunpack.c.l.b16 %v441
      %v741 = vunpack.c.l.b16 %v442
      %v742 = vunpack.c.l.b16 %v443
      %v743 = vunpack.c.l.b16 %v444
      %v744 = vunpack.c.l.b16 %v445
      %v745 = vunpack.c.l.b16 %v446
      %v746 = vunpack.c.l.b16 %v447
      %v747 = vunpack.c.l.b16 %v448
      %v748 = vunpack.c.l.b16 %v449
      %v749 = vunpack.c.l.b16 %v450
      %v750 = vpack.c.b16 %v735, %v734
      %v751 = vpack.c.b16 %v737, %v736
      %v752 = vpack.c.b16 %v739, %v738
      %v753 = vpack.c.b16 %v741, %v740
      %v754 = vpack.c.b16 %v743, %v742
      %v755 = vpack.c.b16 %v745, %v744
      %v756 = vpack.c.b16 %v747, %v746
      %v757 = vpack.c.b16 %v749, %v748
      %766 = vmatprep.subr.bf16.mxu0 0
      %767 = vmatpush1.bf16.msra.mxu0 %v750
      %768 = vmatprep.subr.bf16.mxu0 0
      %769 = vmatpush1.bf16.msra.mxu0 %v751
      %770 = vmatprep.subr.bf16.mxu0 0
      %771 = vmatpush1.bf16.msra.mxu0 %v752
      %772 = vmatprep.subr.bf16.mxu0 0
      %773 = vmatpush1.bf16.msra.mxu0 %v753
      %774 = vmatprep.subr.bf16.mxu0 0
      %775 = vmatpush1.bf16.msra.mxu0 %v754
      %776 = vmatprep.subr.bf16.mxu0 0
      %777 = vmatpush1.bf16.msra.mxu0 %v755
      %778 = vmatprep.subr.bf16.mxu0 0
      %779 = vmatpush1.bf16.msra.mxu0 %v756
      %780 = vmatprep.subr.bf16.mxu0 0
      %781 = vmatpush1.bf16.msra.mxu0 %v757
      %782 = vmatprep.subr.bf16.mxu0 0
      %783 = vmatpush1.bf16.msra.mxu0 0
      %784 = vmatprep.subr.bf16.mxu0 0
      %785 = vmatpush1.bf16.msra.mxu0 0
      %786 = vmatprep.subr.bf16.mxu0 0
      %787 = vmatpush1.bf16.msra.mxu0 0
      %788 = vmatprep.subr.bf16.mxu0 0
      %789 = vmatpush1.bf16.msra.mxu0 0
      %790 = vmatprep.subr.bf16.mxu0 0
      %791 = vmatpush1.bf16.msra.mxu0 0
      %792 = vmatprep.subr.bf16.mxu0 0
      %793 = vmatpush1.bf16.msra.mxu0 0
      %794 = vmatprep.subr.bf16.mxu0 0
      %795 = vmatpush1.bf16.msra.mxu0 0
      %796 = vmatprep.subr.bf16.mxu0 0
      %797 = vmatpush1.bf16.msra.mxu0 0
      %798 = vmatprep.mubr.bf16.mxu0 0
      %799 = vmatmul.mubr.bf16.gmra.mrb[0].mxu0 %v316
      %v800 = vpop.f32.mrb[0].mxu0
      %v801 = vadd.f32 %v656, %v800
      %v802 = vpop.f32.mrb[0].mxu0
      %v803 = vpop.f32.mrb[0].mxu0
      %v804 = vadd.f32 %v659, %v803
      %v805 = vpop.f32.mrb[0].mxu0
      %806 = vmatprep.mubr.bf16.mxu0 0
      %807 = vmatmul.mubr.bf16.gmra.mrb[0].mxu0 %v318
      %v808 = vpop.f32.mrb[0].mxu0
      %v809 = vadd.f32 %v664, %v808
      %v810 = vpop.f32.mrb[0].mxu0
      %v811 = vpop.f32.mrb[0].mxu0
      %v812 = vadd.f32 %v667, %v811
      %v813 = vpop.f32.mrb[0].mxu0
      %814 = vmatprep.mubr.bf16.mxu0 0
      %815 = vmatmul.mubr.bf16.gmra.mrb[0].mxu0 %v320
      %v816 = vpop.f32.mrb[0].mxu0
      %v817 = vadd.f32 %v672, %v816
      %v818 = vpop.f32.mrb[0].mxu0
      %v819 = vpop.f32.mrb[0].mxu0
      %v820 = vadd.f32 %v675, %v819
      %v821 = vpop.f32.mrb[0].mxu0
      %822 = vmatprep.mubr.bf16.mxu0 0
      %823 = vmatmul.mubr.bf16.gmra.mrb[0].mxu0 %v322
      %v824 = vpop.f32.mrb[0].mxu0
      %v825 = vadd.f32 %v680, %v824
      %v826 = vpop.f32.mrb[0].mxu0
      %v827 = vpop.f32.mrb[0].mxu0
      %v828 = vadd.f32 %v683, %v827
      %v829 = vpop.f32.mrb[0].mxu0
      %830 = vmatprep.mubr.bf16.mxu0 0
      %831 = vmatmul.mubr.bf16.gmra.mrb[0].mxu0 %v324
      %v832 = vpop.f32.mrb[0].mxu0
      %v833 = vadd.f32 %v688, %v832
      %v834 = vpop.f32.mrb[0].mxu0
      %v835 = vpop.f32.mrb[0].mxu0
      %v836 = vadd.f32 %v691, %v835
      %v837 = vpop.f32.mrb[0].mxu0
      %838 = vmatprep.mubr.bf16.mxu0 0
      %839 = vmatmul.mubr.bf16.gmra.mrb[0].mxu0 %v326
      %v840 = vpop.f32.mrb[0].mxu0
      %v841 = vadd.f32 %v696, %v840
      %v842 = vpop.f32.mrb[0].mxu0
      %v843 = vpop.f32.mrb[0].mxu0
      %v844 = vadd.f32 %v699, %v843
      %v845 = vpop.f32.mrb[0].mxu0
      %846 = vmatprep.mubr.bf16.mxu0 0
      %847 = vmatmul.mubr.bf16.gmra.mrb[0].mxu0 %v328
      %v848 = vpop.f32.mrb[0].mxu0
      %v849 = vadd.f32 %v704, %v848
      %v850 = vpop.f32.mrb[0].mxu0
      %v851 = vpop.f32.mrb[0].mxu0
      %v852 = vadd.f32 %v707, %v851
      %v853 = vpop.f32.mrb[0].mxu0
      %854 = vmatprep.mubr.bf16.mxu0 0
      %855 = vmatmul.mubr.bf16.gmra.mrb[0].mxu0 %v330
      %v856 = vpop.f32.mrb[0].mxu0
      %v857 = vadd.f32 %v712, %v856
      %v858 = vpop.f32.mrb[0].mxu0
      %v859 = vpop.f32.mrb[0].mxu0
      %v860 = vadd.f32 %v715, %v859
      %v861 = vpop.f32.mrb[0].mxu0
      %862 = vdwg.mxu0
      %vm879 = vcmask 1046528
      %v880 = vrot.slane %v316, 1
      %v881 = vrot.slane %v317, 1
      %v882 = vsel %vm879, %v880, %v881
      %v883 = vrot.slane %v318, 1
      %v884 = vrot.slane %v319, 1
      %v885 = vsel %vm879, %v883, %v884
      %v886 = vrot.slane %v320, 1
      %v887 = vrot.slane %v321, 1
      %v888 = vsel %vm879, %v886, %v887
      %v889 = vrot.slane %v322, 1
      %v890 = vrot.slane %v323, 1
      %v891 = vsel %vm879, %v889, %v890
      %v892 = vrot.slane %v324, 1
      %v893 = vrot.slane %v325, 1
      %v894 = vsel %vm879, %v892, %v893
      %v895 = vrot.slane %v326, 1
      %v896 = vrot.slane %v327, 1
      %v897 = vsel %vm879, %v895, %v896
      %v898 = vrot.slane %v328, 1
      %v899 = vrot.slane %v329, 1
      %v900 = vsel %vm879, %v898, %v899
      %v901 = vrot.slane %v330, 1
      %v902 = vrot.slane %v331, 1
      %v903 = vsel %vm879, %v901, %v902
      %s912 = scalar_lea.vmem %s3, 128
      %v913 = vld [vmem:[%s912] sm:$0xf]
      %v914 = vld [vmem:[%s912 + $0x4] sm:$0xf]
      %v915 = vld [vmem:[%s912 + $0x8] sm:$0xf]
      %v916 = vld [vmem:[%s912 + $0xc] sm:$0xf]
      %v917 = vld [vmem:[%s912 + $0x10] sm:$0xf]
      %v918 = vld [vmem:[%s912 + $0x14] sm:$0xf]
      %v919 = vld [vmem:[%s912 + $0x18] sm:$0xf]
      %v920 = vld [vmem:[%s912 + $0x1c] sm:$0xf]
      %v921 = vld [vmem:[%s912 + $0x20] sm:$0xf]
      %v922 = vld [vmem:[%s912 + $0x24] sm:$0xf]
      %v923 = vld [vmem:[%s912 + $0x28] sm:$0xf]
      %v924 = vld [vmem:[%s912 + $0x2c] sm:$0xf]
      %v925 = vld [vmem:[%s912 + $0x30] sm:$0xf]
      %v926 = vld [vmem:[%s912 + $0x34] sm:$0xf]
      %v927 = vld [vmem:[%s912 + $0x38] sm:$0xf]
      %v928 = vld [vmem:[%s912 + $0x3c] sm:$0xf]
      %v945 = vunpack.c.l.b16 %v913
      %v946 = vunpack.c.l.b16 %v914
      %v947 = vunpack.c.l.b16 %v915
      %v948 = vunpack.c.l.b16 %v916
      %v949 = vunpack.c.l.b16 %v917
      %v950 = vunpack.c.l.b16 %v918
      %v951 = vunpack.c.l.b16 %v919
      %v952 = vunpack.c.l.b16 %v920
      %v953 = vunpack.c.l.b16 %v921
      %v954 = vunpack.c.l.b16 %v922
      %v955 = vunpack.c.l.b16 %v923
      %v956 = vunpack.c.l.b16 %v924
      %v957 = vunpack.c.l.b16 %v925
      %v958 = vunpack.c.l.b16 %v926
      %v959 = vunpack.c.l.b16 %v927
      %v960 = vunpack.c.l.b16 %v928
      %v961 = vpack.c.b16 %v946, %v945
      %v962 = vpack.c.b16 %v948, %v947
      %v963 = vpack.c.b16 %v950, %v949
      %v964 = vpack.c.b16 %v952, %v951
      %v965 = vpack.c.b16 %v954, %v953
      %v966 = vpack.c.b16 %v956, %v955
      %v967 = vpack.c.b16 %v958, %v957
      %v968 = vpack.c.b16 %v960, %v959
      %977 = vmatprep.subr.bf16.mxu0 0
      %978 = vmatpush1.bf16.msra.mxu0 %v961
      %979 = vmatprep.subr.bf16.mxu0 0
      %980 = vmatpush1.bf16.msra.mxu0 %v962
      %981 = vmatprep.subr.bf16.mxu0 0
      %982 = vmatpush1.bf16.msra.mxu0 %v963
      %983 = vmatprep.subr.bf16.mxu0 0
      %984 = vmatpush1.bf16.msra.mxu0 %v964
      %985 = vmatprep.subr.bf16.mxu0 0
      %986 = vmatpush1.bf16.msra.mxu0 %v965
      %987 = vmatprep.subr.bf16.mxu0 0
      %988 = vmatpush1.bf16.msra.mxu0 %v966
      %989 = vmatprep.subr.bf16.mxu0 0
      %990 = vmatpush1.bf16.msra.mxu0 %v967
      %991 = vmatprep.subr.bf16.mxu0 0
      %992 = vmatpush1.bf16.msra.mxu0 %v968
      %993 = vmatprep.subr.bf16.mxu0 0
      %994 = vmatpush1.bf16.msra.mxu0 0
      %995 = vmatprep.subr.bf16.mxu0 0
      %996 = vmatpush1.bf16.msra.mxu0 0
      %997 = vmatprep.subr.bf16.mxu0 0
      %998 = vmatpush1.bf16.msra.mxu0 0
      %999 = vmatprep.subr.bf16.mxu0 0
      %1000 = vmatpush1.bf16.msra.mxu0 0
      %1001 = vmatprep.subr.bf16.mxu0 0
      %1002 = vmatpush1.bf16.msra.mxu0 0
      %1003 = vmatprep.subr.bf16.mxu0 0
      %1004 = vmatpush1.bf16.msra.mxu0 0
      %1005 = vmatprep.subr.bf16.mxu0 0
      %1006 = vmatpush1.bf16.msra.mxu0 0
      %1007 = vmatprep.subr.bf16.mxu0 0
      %1008 = vmatpush1.bf16.msra.mxu0 0
      %1009 = vmatprep.mubr.bf16.mxu0 0
      %1010 = vmatmul.mubr.bf16.gmra.mrb[0].mxu0 %v882
      %v1011 = vpop.f32.mrb[0].mxu0
      %v1012 = vadd.f32 0.0, %v1011
      %v1013 = vpop.f32.mrb[0].mxu0
      %v1014 = vpop.f32.mrb[0].mxu0
      %v1015 = vadd.f32 0.0, %v1014
      %v1016 = vpop.f32.mrb[0].mxu0
      %1017 = vmatprep.mubr.bf16.mxu0 0
      %1018 = vmatmul.mubr.bf16.gmra.mrb[0].mxu0 %v885
      %v1019 = vpop.f32.mrb[0].mxu0
      %v1020 = vadd.f32 0.0, %v1019
      %v1021 = vpop.f32.mrb[0].mxu0
      %v1022 = vpop.f32.mrb[0].mxu0
      %v1023 = vadd.f32 0.0, %v1022
      %v1024 = vpop.f32.mrb[0].mxu0
      %1025 = vmatprep.mubr.bf16.mxu0 0
      %1026 = vmatmul.mubr.bf16.gmra.mrb[0].mxu0 %v888
      %v1027 = vpop.f32.mrb[0].mxu0
      %v1028 = vadd.f32 0.0, %v1027
      %v1029 = vpop.f32.mrb[0].mxu0
      %v1030 = vpop.f32.mrb[0].mxu0
      %v1031 = vadd.f32 0.0, %v1030
      %v1032 = vpop.f32.mrb[0].mxu0
      %1033 = vmatprep.mubr.bf16.mxu0 0
      %1034 = vmatmul.mubr.bf16.gmra.mrb[0].mxu0 %v891
      %v1035 = vpop.f32.mrb[0].mxu0
      %v1036 = vadd.f32 0.0, %v1035
      %v1037 = vpop.f32.mrb[0].mxu0
      %v1038 = vpop.f32.mrb[0].mxu0
      %v1039 = vadd.f32 0.0, %v1038
      %v1040 = vpop.f32.mrb[0].mxu0
      %1041 = vmatprep.mubr.bf16.mxu0 0
      %1042 = vmatmul.mubr.bf16.gmra.mrb[0].mxu0 %v894
      %v1043 = vpop.f32.mrb[0].mxu0
      %v1044 = vadd.f32 0.0, %v1043
      %v1045 = vpop.f32.mrb[0].mxu0
      %v1046 = vpop.f32.mrb[0].mxu0
      %v1047 = vadd.f32 0.0, %v1046
      %v1048 = vpop.f32.mrb[0].mxu0
      %1049 = vmatprep.mubr.bf16.mxu0 0
      %1050 = vmatmul.mubr.bf16.gmra.mrb[0].mxu0 %v897
      %v1051 = vpop.f32.mrb[0].mxu0
      %v1052 = vadd.f32 0.0, %v1051
      %v1053 = vpop.f32.mrb[0].mxu0
      %v1054 = vpop.f32.mrb[0].mxu0
      %v1055 = vadd.f32 0.0, %v1054
      %v1056 = vpop.f32.mrb[0].mxu0
      %1057 = vmatprep.mubr.bf16.mxu0 0
      %1058 = vmatmul.mubr.bf16.gmra.mrb[0].mxu0 %v900
      %v1059 = vpop.f32.mrb[0].mxu0
      %v1060 = vadd.f32 0.0, %v1059
      %v1061 = vpop.f32.mrb[0].mxu0
      %v1062 = vpop.f32.mrb[0].mxu0
      %v1063 = vadd.f32 0.0, %v1062
      %v1064 = vpop.f32.mrb[0].mxu0
      %1065 = vmatprep.mubr.bf16.mxu0 0
      %1066 = vmatmul.mubr.bf16.gmra.mrb[0].mxu0 %v903
      %v1067 = vpop.f32.mrb[0].mxu0
      %v1068 = vadd.f32 0.0, %v1067
      %v1069 = vpop.f32.mrb[0].mxu0
      %v1070 = vpop.f32.mrb[0].mxu0
      %v1071 = vadd.f32 0.0, %v1070
      %v1072 = vpop.f32.mrb[0].mxu0
      %1073 = vdwg.mxu0
      %v1074 = vadd.f32 %v801, %v1012
      %v1075 = vadd.f32 %v804, %v1015
      %v1076 = vadd.f32 %v809, %v1020
      %v1077 = vadd.f32 %v812, %v1023
      %v1078 = vadd.f32 %v817, %v1028
      %v1079 = vadd.f32 %v820, %v1031
      %v1080 = vadd.f32 %v825, %v1036
      %v1081 = vadd.f32 %v828, %v1039
      %v1082 = vadd.f32 %v833, %v1044
      %v1083 = vadd.f32 %v836, %v1047
      %v1084 = vadd.f32 %v841, %v1052
      %v1085 = vadd.f32 %v844, %v1055
      %v1086 = vadd.f32 %v849, %v1060
      %v1087 = vadd.f32 %v852, %v1063
      %v1088 = vadd.f32 %v857, %v1068
      %v1089 = vadd.f32 %v860, %v1071
      %s1090 = scalar_lea.vmem %s3, 192
      %v1091 = vld [vmem:[%s1090] sm:$0xf]
      %v1092 = vld [vmem:[%s1090 + $0x4] sm:$0xf]
      %v1093 = vld [vmem:[%s1090 + $0x8] sm:$0xf]
      %v1094 = vld [vmem:[%s1090 + $0xc] sm:$0xf]
      %v1095 = vld [vmem:[%s1090 + $0x10] sm:$0xf]
      %v1096 = vld [vmem:[%s1090 + $0x14] sm:$0xf]
      %v1097 = vld [vmem:[%s1090 + $0x18] sm:$0xf]
      %v1098 = vld [vmem:[%s1090 + $0x1c] sm:$0xf]
      %v1099 = vld [vmem:[%s1090 + $0x20] sm:$0xf]
      %v1100 = vld [vmem:[%s1090 + $0x24] sm:$0xf]
      %v1101 = vld [vmem:[%s1090 + $0x28] sm:$0xf]
      %v1102 = vld [vmem:[%s1090 + $0x2c] sm:$0xf]
      %v1103 = vld [vmem:[%s1090 + $0x30] sm:$0xf]
      %v1104 = vld [vmem:[%s1090 + $0x34] sm:$0xf]
      %v1105 = vld [vmem:[%s1090 + $0x38] sm:$0xf]
      %v1106 = vld [vmem:[%s1090 + $0x3c] sm:$0xf]
      %v1123 = vunpack.c.l.b16 %v1091
      %v1124 = vunpack.c.l.b16 %v1092
      %v1125 = vunpack.c.l.b16 %v1093
      %v1126 = vunpack.c.l.b16 %v1094
      %v1127 = vunpack.c.l.b16 %v1095
      %v1128 = vunpack.c.l.b16 %v1096
      %v1129 = vunpack.c.l.b16 %v1097
      %v1130 = vunpack.c.l.b16 %v1098
      %v1131 = vunpack.c.l.b16 %v1099
      %v1132 = vunpack.c.l.b16 %v1100
      %v1133 = vunpack.c.l.b16 %v1101
      %v1134 = vunpack.c.l.b16 %v1102
      %v1135 = vunpack.c.l.b16 %v1103
      %v1136 = vunpack.c.l.b16 %v1104
      %v1137 = vunpack.c.l.b16 %v1105
      %v1138 = vunpack.c.l.b16 %v1106
      %v1139 = vpack.c.b16 %v1124, %v1123
      %v1140 = vpack.c.b16 %v1126, %v1125
      %v1141 = vpack.c.b16 %v1128, %v1127
      %v1142 = vpack.c.b16 %v1130, %v1129
      %v1143 = vpack.c.b16 %v1132, %v1131
      %v1144 = vpack.c.b16 %v1134, %v1133
      %v1145 = vpack.c.b16 %v1136, %v1135
      %v1146 = vpack.c.b16 %v1138, %v1137
      %1155 = vmatprep.subr.bf16.mxu0 0
      %1156 = vmatpush1.bf16.msra.mxu0 %v1139
      %1157 = vmatprep.subr.bf16.mxu0 0
      %1158 = vmatpush1.bf16.msra.mxu0 %v1140
      %1159 = vmatprep.subr.bf16.mxu0 0
      %1160 = vmatpush1.bf16.msra.mxu0 %v1141
      %1161 = vmatprep.subr.bf16.mxu0 0
      %1162 = vmatpush1.bf16.msra.mxu0 %v1142
      %1163 = vmatprep.subr.bf16.mxu0 0
      %1164 = vmatpush1.bf16.msra.mxu0 %v1143
      %1165 = vmatprep.subr.bf16.mxu0 0
      %1166 = vmatpush1.bf16.msra.mxu0 %v1144
      %1167 = vmatprep.subr.bf16.mxu0 0
      %1168 = vmatpush1.bf16.msra.mxu0 %v1145
      %1169 = vmatprep.subr.bf16.mxu0 0
      %1170 = vmatpush1.bf16.msra.mxu0 %v1146
      %1171 = vmatprep.subr.bf16.mxu0 0
      %1172 = vmatpush1.bf16.msra.mxu0 0
      %1173 = vmatprep.subr.bf16.mxu0 0
      %1174 = vmatpush1.bf16.msra.mxu0 0
      %1175 = vmatprep.subr.bf16.mxu0 0
      %1176 = vmatpush1.bf16.msra.mxu0 0
      %1177 = vmatprep.subr.bf16.mxu0 0
      %1178 = vmatpush1.bf16.msra.mxu0 0
      %1179 = vmatprep.subr.bf16.mxu0 0
      %1180 = vmatpush1.bf16.msra.mxu0 0
      %1181 = vmatprep.subr.bf16.mxu0 0
      %1182 = vmatpush1.bf16.msra.mxu0 0
      %1183 = vmatprep.subr.bf16.mxu0 0
      %1184 = vmatpush1.bf16.msra.mxu0 0
      %1185 = vmatprep.subr.bf16.mxu0 0
      %1186 = vmatpush1.bf16.msra.mxu0 0
      %1187 = vmatprep.mubr.bf16.mxu0 0
      %1188 = vmatmul.mubr.bf16.gmra.mrb[0].mxu0 %v318
      %v1189 = vpop.f32.mrb[0].mxu0
      %v1190 = vadd.f32 0.0, %v1189
      %v1191 = vpop.f32.mrb[0].mxu0
      %v1192 = vpop.f32.mrb[0].mxu0
      %v1193 = vadd.f32 0.0, %v1192
      %v1194 = vpop.f32.mrb[0].mxu0
      %1195 = vmatprep.mubr.bf16.mxu0 0
      %1196 = vmatmul.mubr.bf16.gmra.mrb[0].mxu0 %v320
      %v1197 = vpop.f32.mrb[0].mxu0
      %v1198 = vadd.f32 0.0, %v1197
      %v1199 = vpop.f32.mrb[0].mxu0
      %v1200 = vpop.f32.mrb[0].mxu0
      %v1201 = vadd.f32 0.0, %v1200
      %v1202 = vpop.f32.mrb[0].mxu0
      %1203 = vmatprep.mubr.bf16.mxu0 0
      %1204 = vmatmul.mubr.bf16.gmra.mrb[0].mxu0 %v322
      %v1205 = vpop.f32.mrb[0].mxu0
      %v1206 = vadd.f32 0.0, %v1205
      %v1207 = vpop.f32.mrb[0].mxu0
      %v1208 = vpop.f32.mrb[0].mxu0
      %v1209 = vadd.f32 0.0, %v1208
      %v1210 = vpop.f32.mrb[0].mxu0
      %1211 = vmatprep.mubr.bf16.mxu0 0
      %1212 = vmatmul.mubr.bf16.gmra.mrb[0].mxu0 %v324
      %v1213 = vpop.f32.mrb[0].mxu0
      %v1214 = vadd.f32 0.0, %v1213
      %v1215 = vpop.f32.mrb[0].mxu0
      %v1216 = vpop.f32.mrb[0].mxu0
      %v1217 = vadd.f32 0.0, %v1216
      %v1218 = vpop.f32.mrb[0].mxu0
      %1219 = vmatprep.mubr.bf16.mxu0 0
      %1220 = vmatmul.mubr.bf16.gmra.mrb[0].mxu0 %v326
      %v1221 = vpop.f32.mrb[0].mxu0
      %v1222 = vadd.f32 0.0, %v1221
      %v1223 = vpop.f32.mrb[0].mxu0
      %v1224 = vpop.f32.mrb[0].mxu0
      %v1225 = vadd.f32 0.0, %v1224
      %v1226 = vpop.f32.mrb[0].mxu0
      %1227 = vmatprep.mubr.bf16.mxu0 0
      %1228 = vmatmul.mubr.bf16.gmra.mrb[0].mxu0 %v328
      %v1229 = vpop.f32.mrb[0].mxu0
      %v1230 = vadd.f32 0.0, %v1229
      %v1231 = vpop.f32.mrb[0].mxu0
      %v1232 = vpop.f32.mrb[0].mxu0
      %v1233 = vadd.f32 0.0, %v1232
      %v1234 = vpop.f32.mrb[0].mxu0
      %1235 = vmatprep.mubr.bf16.mxu0 0
      %1236 = vmatmul.mubr.bf16.gmra.mrb[0].mxu0 %v330
      %v1237 = vpop.f32.mrb[0].mxu0
      %v1238 = vadd.f32 0.0, %v1237
      %v1239 = vpop.f32.mrb[0].mxu0
      %v1240 = vpop.f32.mrb[0].mxu0
      %v1241 = vadd.f32 0.0, %v1240
      %v1242 = vpop.f32.mrb[0].mxu0
      %1243 = vmatprep.mubr.bf16.mxu0 0
      %1244 = vmatmul.mubr.bf16.gmra.mrb[0].mxu0 %v332
      %v1245 = vpop.f32.mrb[0].mxu0
      %v1246 = vadd.f32 0.0, %v1245
      %v1247 = vpop.f32.mrb[0].mxu0
      %v1248 = vpop.f32.mrb[0].mxu0
      %v1249 = vadd.f32 0.0, %v1248
      %v1250 = vpop.f32.mrb[0].mxu0
      %1251 = vdwg.mxu0
      %v1252 = vadd.f32 %v1074, %v1190
      %v1253 = vadd.f32 %v1075, %v1193
      %v1254 = vadd.f32 %v1076, %v1198
      %v1255 = vadd.f32 %v1077, %v1201
      %v1256 = vadd.f32 %v1078, %v1206
      %v1257 = vadd.f32 %v1079, %v1209
      %v1258 = vadd.f32 %v1080, %v1214
      %v1259 = vadd.f32 %v1081, %v1217
      %v1260 = vadd.f32 %v1082, %v1222
      %v1261 = vadd.f32 %v1083, %v1225
      %v1262 = vadd.f32 %v1084, %v1230
      %v1263 = vadd.f32 %v1085, %v1233
      %v1264 = vadd.f32 %v1086, %v1238
      %v1265 = vadd.f32 %v1087, %v1241
      %v1266 = vadd.f32 %v1088, %v1246
      %v1267 = vadd.f32 %v1089, %v1249
      %v1269 = vshrl.u32 %v332, 16
      %v1271 = vshll.u32 %v332, 16
      %v1273 = vrot.slane %v1271, 1
      %v1274 = vor.u32 %v1269, %v1273
      %v1276 = vshll.u32 %v333, 16
      %v1278 = vrot.slane %v1276, 1
      %v1279 = vsel %vm451, %v1274, %v1278
      %s1281 = scalar_lea.vmem %s3, 256
      %v1282 = vld [vmem:[%s1281] sm:$0xf]
      %v1283 = vld [vmem:[%s1281 + $0x4] sm:$0xf]
      %v1284 = vld [vmem:[%s1281 + $0x8] sm:$0xf]
      %v1285 = vld [vmem:[%s1281 + $0xc] sm:$0xf]
      %v1286 = vld [vmem:[%s1281 + $0x10] sm:$0xf]
      %v1287 = vld [vmem:[%s1281 + $0x14] sm:$0xf]
      %v1288 = vld [vmem:[%s1281 + $0x18] sm:$0xf]
      %v1289 = vld [vmem:[%s1281 + $0x1c] sm:$0xf]
      %v1290 = vld [vmem:[%s1281 + $0x20] sm:$0xf]
      %v1291 = vld [vmem:[%s1281 + $0x24] sm:$0xf]
      %v1292 = vld [vmem:[%s1281 + $0x28] sm:$0xf]
      %v1293 = vld [vmem:[%s1281 + $0x2c] sm:$0xf]
      %v1294 = vld [vmem:[%s1281 + $0x30] sm:$0xf]
      %v1295 = vld [vmem:[%s1281 + $0x34] sm:$0xf]
      %v1296 = vld [vmem:[%s1281 + $0x38] sm:$0xf]
      %v1297 = vld [vmem:[%s1281 + $0x3c] sm:$0xf]
      %v1314 = vunpack.c.l.b16 %v1282
      %v1315 = vunpack.c.l.b16 %v1283
      %v1316 = vunpack.c.l.b16 %v1284
      %v1317 = vunpack.c.l.b16 %v1285
      %v1318 = vunpack.c.l.b16 %v1286
      %v1319 = vunpack.c.l.b16 %v1287
      %v1320 = vunpack.c.l.b16 %v1288
      %v1321 = vunpack.c.l.b16 %v1289
      %v1322 = vunpack.c.l.b16 %v1290
      %v1323 = vunpack.c.l.b16 %v1291
      %v1324 = vunpack.c.l.b16 %v1292
      %v1325 = vunpack.c.l.b16 %v1293
      %v1326 = vunpack.c.l.b16 %v1294
      %v1327 = vunpack.c.l.b16 %v1295
      %v1328 = vunpack.c.l.b16 %v1296
      %v1329 = vunpack.c.l.b16 %v1297
      %v1330 = vpack.c.b16 %v1315, %v1314
      %v1331 = vpack.c.b16 %v1317, %v1316
      %v1332 = vpack.c.b16 %v1319, %v1318
      %v1333 = vpack.c.b16 %v1321, %v1320
      %v1334 = vpack.c.b16 %v1323, %v1322
      %v1335 = vpack.c.b16 %v1325, %v1324
      %v1336 = vpack.c.b16 %v1327, %v1326
      %v1337 = vpack.c.b16 %v1329, %v1328
      %1346 = vmatprep.subr.bf16.mxu0 0
      %1347 = vmatpush1.bf16.msra.mxu0 %v1330
      %1348 = vmatprep.subr.bf16.mxu0 0
      %1349 = vmatpush1.bf16.msra.mxu0 %v1331
      %1350 = vmatprep.subr.bf16.mxu0 0
      %1351 = vmatpush1.bf16.msra.mxu0 %v1332
      %1352 = vmatprep.subr.bf16.mxu0 0
      %1353 = vmatpush1.bf16.msra.mxu0 %v1333
      %1354 = vmatprep.subr.bf16.mxu0 0
      %1355 = vmatpush1.bf16.msra.mxu0 %v1334
      %1356 = vmatprep.subr.bf16.mxu0 0
      %1357 = vmatpush1.bf16.msra.mxu0 %v1335
      %1358 = vmatprep.subr.bf16.mxu0 0
      %1359 = vmatpush1.bf16.msra.mxu0 %v1336
      %1360 = vmatprep.subr.bf16.mxu0 0
      %1361 = vmatpush1.bf16.msra.mxu0 %v1337
      %1362 = vmatprep.subr.bf16.mxu0 0
      %1363 = vmatpush1.bf16.msra.mxu0 0
      %1364 = vmatprep.subr.bf16.mxu0 0
      %1365 = vmatpush1.bf16.msra.mxu0 0
      %1366 = vmatprep.subr.bf16.mxu0 0
      %1367 = vmatpush1.bf16.msra.mxu0 0
      %1368 = vmatprep.subr.bf16.mxu0 0
      %1369 = vmatpush1.bf16.msra.mxu0 0
      %1370 = vmatprep.subr.bf16.mxu0 0
      %1371 = vmatpush1.bf16.msra.mxu0 0
      %1372 = vmatprep.subr.bf16.mxu0 0
      %1373 = vmatpush1.bf16.msra.mxu0 0
      %1374 = vmatprep.subr.bf16.mxu0 0
      %1375 = vmatpush1.bf16.msra.mxu0 0
      %1376 = vmatprep.subr.bf16.mxu0 0
      %1377 = vmatpush1.bf16.msra.mxu0 0
      %1378 = vmatprep.mubr.bf16.mxu0 0
      %1379 = vmatmul.mubr.bf16.gmra.mrb[0].mxu0 %v475
      %v1380 = vpop.f32.mrb[0].mxu0
      %v1381 = vadd.f32 0.0, %v1380
      %v1382 = vpop.f32.mrb[0].mxu0
      %v1383 = vpop.f32.mrb[0].mxu0
      %v1384 = vadd.f32 0.0, %v1383
      %v1385 = vpop.f32.mrb[0].mxu0
      %1386 = vmatprep.mubr.bf16.mxu0 0
      %1387 = vmatmul.mubr.bf16.gmra.mrb[0].mxu0 %v487
      %v1388 = vpop.f32.mrb[0].mxu0
      %v1389 = vadd.f32 0.0, %v1388
      %v1390 = vpop.f32.mrb[0].mxu0
      %v1391 = vpop.f32.mrb[0].mxu0
      %v1392 = vadd.f32 0.0, %v1391
      %v1393 = vpop.f32.mrb[0].mxu0
      %1394 = vmatprep.mubr.bf16.mxu0 0
      %1395 = vmatmul.mubr.bf16.gmra.mrb[0].mxu0 %v499
      %v1396 = vpop.f32.mrb[0].mxu0
      %v1397 = vadd.f32 0.0, %v1396
      %v1398 = vpop.f32.mrb[0].mxu0
      %v1399 = vpop.f32.mrb[0].mxu0
      %v1400 = vadd.f32 0.0, %v1399
      %v1401 = vpop.f32.mrb[0].mxu0
      %1402 = vmatprep.mubr.bf16.mxu0 0
      %1403 = vmatmul.mubr.bf16.gmra.mrb[0].mxu0 %v511
      %v1404 = vpop.f32.mrb[0].mxu0
      %v1405 = vadd.f32 0.0, %v1404
      %v1406 = vpop.f32.mrb[0].mxu0
      %v1407 = vpop.f32.mrb[0].mxu0
      %v1408 = vadd.f32 0.0, %v1407
      %v1409 = vpop.f32.mrb[0].mxu0
      %1410 = vmatprep.mubr.bf16.mxu0 0
      %1411 = vmatmul.mubr.bf16.gmra.mrb[0].mxu0 %v523
      %v1412 = vpop.f32.mrb[0].mxu0
      %v1413 = vadd.f32 0.0, %v1412
      %v1414 = vpop.f32.mrb[0].mxu0
      %v1415 = vpop.f32.mrb[0].mxu0
      %v1416 = vadd.f32 0.0, %v1415
      %v1417 = vpop.f32.mrb[0].mxu0
      %1418 = vmatprep.mubr.bf16.mxu0 0
      %1419 = vmatmul.mubr.bf16.gmra.mrb[0].mxu0 %v535
      %v1420 = vpop.f32.mrb[0].mxu0
      %v1421 = vadd.f32 0.0, %v1420
      %v1422 = vpop.f32.mrb[0].mxu0
      %v1423 = vpop.f32.mrb[0].mxu0
      %v1424 = vadd.f32 0.0, %v1423
      %v1425 = vpop.f32.mrb[0].mxu0
      %1426 = vmatprep.mubr.bf16.mxu0 0
      %1427 = vmatmul.mubr.bf16.gmra.mrb[0].mxu0 %v547
      %v1428 = vpop.f32.mrb[0].mxu0
      %v1429 = vadd.f32 0.0, %v1428
      %v1430 = vpop.f32.mrb[0].mxu0
      %v1431 = vpop.f32.mrb[0].mxu0
      %v1432 = vadd.f32 0.0, %v1431
      %v1433 = vpop.f32.mrb[0].mxu0
      %1434 = vmatprep.mubr.bf16.mxu0 0
      %1435 = vmatmul.mubr.bf16.gmra.mrb[0].mxu0 %v1279
      %v1436 = vpop.f32.mrb[0].mxu0
      %v1437 = vadd.f32 0.0, %v1436
      %v1438 = vpop.f32.mrb[0].mxu0
      %v1439 = vpop.f32.mrb[0].mxu0
      %v1440 = vadd.f32 0.0, %v1439
      %v1441 = vpop.f32.mrb[0].mxu0
      %1442 = vdwg.mxu0
      %v1443 = vadd.f32 %v1252, %v1381
      %v1444 = vadd.f32 %v1253, %v1384
      %v1445 = vadd.f32 %v1254, %v1389
      %v1446 = vadd.f32 %v1255, %v1392
      %v1447 = vadd.f32 %v1256, %v1397
      %v1448 = vadd.f32 %v1257, %v1400
      %v1449 = vadd.f32 %v1258, %v1405
      %v1450 = vadd.f32 %v1259, %v1408
      %v1451 = vadd.f32 %v1260, %v1413
      %v1452 = vadd.f32 %v1261, %v1416
      %v1453 = vadd.f32 %v1262, %v1421
      %v1454 = vadd.f32 %v1263, %v1424
      %v1455 = vadd.f32 %v1264, %v1429
      %v1456 = vadd.f32 %v1265, %v1432
      %v1457 = vadd.f32 %v1266, %v1437
      %v1458 = vadd.f32 %v1267, %v1440
      %v1461 = vrot.slane %v332, 1
      %v1462 = vrot.slane %v333, 1
      %v1463 = vsel %vm879, %v1461, %v1462
      %s1465 = scalar_lea.vmem %s3, 320
      %v1466 = vld [vmem:[%s1465] sm:$0xf]
      %v1467 = vld [vmem:[%s1465 + $0x4] sm:$0xf]
      %v1468 = vld [vmem:[%s1465 + $0x8] sm:$0xf]
      %v1469 = vld [vmem:[%s1465 + $0xc] sm:$0xf]
      %v1470 = vld [vmem:[%s1465 + $0x10] sm:$0xf]
      %v1471 = vld [vmem:[%s1465 + $0x14] sm:$0xf]
      %v1472 = vld [vmem:[%s1465 + $0x18] sm:$0xf]
      %v1473 = vld [vmem:[%s1465 + $0x1c] sm:$0xf]
      %v1474 = vld [vmem:[%s1465 + $0x20] sm:$0xf]
      %v1475 = vld [vmem:[%s1465 + $0x24] sm:$0xf]
      %v1476 = vld [vmem:[%s1465 + $0x28] sm:$0xf]
      %v1477 = vld [vmem:[%s1465 + $0x2c] sm:$0xf]
      %v1478 = vld [vmem:[%s1465 + $0x30] sm:$0xf]
      %v1479 = vld [vmem:[%s1465 + $0x34] sm:$0xf]
      %v1480 = vld [vmem:[%s1465 + $0x38] sm:$0xf]
      %v1481 = vld [vmem:[%s1465 + $0x3c] sm:$0xf]
      %v1498 = vunpack.c.l.b16 %v1466
      %v1499 = vunpack.c.l.b16 %v1467
      %v1500 = vunpack.c.l.b16 %v1468
      %v1501 = vunpack.c.l.b16 %v1469
      %v1502 = vunpack.c.l.b16 %v1470
      %v1503 = vunpack.c.l.b16 %v1471
      %v1504 = vunpack.c.l.b16 %v1472
      %v1505 = vunpack.c.l.b16 %v1473
      %v1506 = vunpack.c.l.b16 %v1474
      %v1507 = vunpack.c.l.b16 %v1475
      %v1508 = vunpack.c.l.b16 %v1476
      %v1509 = vunpack.c.l.b16 %v1477
      %v1510 = vunpack.c.l.b16 %v1478
      %v1511 = vunpack.c.l.b16 %v1479
      %v1512 = vunpack.c.l.b16 %v1480
      %v1513 = vunpack.c.l.b16 %v1481
      %v1514 = vpack.c.b16 %v1499, %v1498
      %v1515 = vpack.c.b16 %v1501, %v1500
      %v1516 = vpack.c.b16 %v1503, %v1502
      %v1517 = vpack.c.b16 %v1505, %v1504
      %v1518 = vpack.c.b16 %v1507, %v1506
      %v1519 = vpack.c.b16 %v1509, %v1508
      %v1520 = vpack.c.b16 %v1511, %v1510
      %v1521 = vpack.c.b16 %v1513, %v1512
      %1530 = vmatprep.subr.bf16.mxu0 0
      %1531 = vmatpush1.bf16.msra.mxu0 %v1514
      %1532 = vmatprep.subr.bf16.mxu0 0
      %1533 = vmatpush1.bf16.msra.mxu0 %v1515
      %1534 = vmatprep.subr.bf16.mxu0 0
      %1535 = vmatpush1.bf16.msra.mxu0 %v1516
      %1536 = vmatprep.subr.bf16.mxu0 0
      %1537 = vmatpush1.bf16.msra.mxu0 %v1517
      %1538 = vmatprep.subr.bf16.mxu0 0
      %1539 = vmatpush1.bf16.msra.mxu0 %v1518
      %1540 = vmatprep.subr.bf16.mxu0 0
      %1541 = vmatpush1.bf16.msra.mxu0 %v1519
      %1542 = vmatprep.subr.bf16.mxu0 0
      %1543 = vmatpush1.bf16.msra.mxu0 %v1520
      %1544 = vmatprep.subr.bf16.mxu0 0
      %1545 = vmatpush1.bf16.msra.mxu0 %v1521
      %1546 = vmatprep.subr.bf16.mxu0 0
      %1547 = vmatpush1.bf16.msra.mxu0 0
      %1548 = vmatprep.subr.bf16.mxu0 0
      %1549 = vmatpush1.bf16.msra.mxu0 0
      %1550 = vmatprep.subr.bf16.mxu0 0
      %1551 = vmatpush1.bf16.msra.mxu0 0
      %1552 = vmatprep.subr.bf16.mxu0 0
      %1553 = vmatpush1.bf16.msra.mxu0 0
      %1554 = vmatprep.subr.bf16.mxu0 0
      %1555 = vmatpush1.bf16.msra.mxu0 0
      %1556 = vmatprep.subr.bf16.mxu0 0
      %1557 = vmatpush1.bf16.msra.mxu0 0
      %1558 = vmatprep.subr.bf16.mxu0 0
      %1559 = vmatpush1.bf16.msra.mxu0 0
      %1560 = vmatprep.subr.bf16.mxu0 0
      %1561 = vmatpush1.bf16.msra.mxu0 0
      %1562 = vmatprep.mubr.bf16.mxu0 0
      %1563 = vmatmul.mubr.bf16.gmra.mrb[0].mxu0 %v885
      %v1564 = vpop.f32.mrb[0].mxu0
      %v1565 = vadd.f32 0.0, %v1564
      %v1566 = vpop.f32.mrb[0].mxu0
      %v1567 = vpop.f32.mrb[0].mxu0
      %v1568 = vadd.f32 0.0, %v1567
      %v1569 = vpop.f32.mrb[0].mxu0
      %1570 = vmatprep.mubr.bf16.mxu0 0
      %1571 = vmatmul.mubr.bf16.gmra.mrb[0].mxu0 %v888
      %v1572 = vpop.f32.mrb[0].mxu0
      %v1573 = vadd.f32 0.0, %v1572
      %v1574 = vpop.f32.mrb[0].mxu0
      %v1575 = vpop.f32.mrb[0].mxu0
      %v1576 = vadd.f32 0.0, %v1575
      %v1577 = vpop.f32.mrb[0].mxu0
      %1578 = vmatprep.mubr.bf16.mxu0 0
      %1579 = vmatmul.mubr.bf16.gmra.mrb[0].mxu0 %v891
      %v1580 = vpop.f32.mrb[0].mxu0
      %v1581 = vadd.f32 0.0, %v1580
      %v1582 = vpop.f32.mrb[0].mxu0
      %v1583 = vpop.f32.mrb[0].mxu0
      %v1584 = vadd.f32 0.0, %v1583
      %v1585 = vpop.f32.mrb[0].mxu0
      %1586 = vmatprep.mubr.bf16.mxu0 0
      %1587 = vmatmul.mubr.bf16.gmra.mrb[0].mxu0 %v894
      %v1588 = vpop.f32.mrb[0].mxu0
      %v1589 = vadd.f32 0.0, %v1588
      %v1590 = vpop.f32.mrb[0].mxu0
      %v1591 = vpop.f32.mrb[0].mxu0
      %v1592 = vadd.f32 0.0, %v1591
      %v1593 = vpop.f32.mrb[0].mxu0
      %1594 = vmatprep.mubr.bf16.mxu0 0
      %1595 = vmatmul.mubr.bf16.gmra.mrb[0].mxu0 %v897
      %v1596 = vpop.f32.mrb[0].mxu0
      %v1597 = vadd.f32 0.0, %v1596
      %v1598 = vpop.f32.mrb[0].mxu0
      %v1599 = vpop.f32.mrb[0].mxu0
      %v1600 = vadd.f32 0.0, %v1599
      %v1601 = vpop.f32.mrb[0].mxu0
      %1602 = vmatprep.mubr.bf16.mxu0 0
      %1603 = vmatmul.mubr.bf16.gmra.mrb[0].mxu0 %v900
      %v1604 = vpop.f32.mrb[0].mxu0
      %v1605 = vadd.f32 0.0, %v1604
      %v1606 = vpop.f32.mrb[0].mxu0
      %v1607 = vpop.f32.mrb[0].mxu0
      %v1608 = vadd.f32 0.0, %v1607
      %v1609 = vpop.f32.mrb[0].mxu0
      %1610 = vmatprep.mubr.bf16.mxu0 0
      %1611 = vmatmul.mubr.bf16.gmra.mrb[0].mxu0 %v903
      %v1612 = vpop.f32.mrb[0].mxu0
      %v1613 = vadd.f32 0.0, %v1612
      %v1614 = vpop.f32.mrb[0].mxu0
      %v1615 = vpop.f32.mrb[0].mxu0
      %v1616 = vadd.f32 0.0, %v1615
      %v1617 = vpop.f32.mrb[0].mxu0
      %1618 = vmatprep.mubr.bf16.mxu0 0
      %1619 = vmatmul.mubr.bf16.gmra.mrb[0].mxu0 %v1463
      %v1620 = vpop.f32.mrb[0].mxu0
      %v1621 = vadd.f32 0.0, %v1620
      %v1622 = vpop.f32.mrb[0].mxu0
      %v1623 = vpop.f32.mrb[0].mxu0
      %v1624 = vadd.f32 0.0, %v1623
      %v1625 = vpop.f32.mrb[0].mxu0
      %1626 = vdwg.mxu0
      %v1627 = vadd.f32 %v1443, %v1565
      %v1628 = vadd.f32 %v1444, %v1568
      %v1629 = vadd.f32 %v1445, %v1573
      %v1630 = vadd.f32 %v1446, %v1576
      %v1631 = vadd.f32 %v1447, %v1581
      %v1632 = vadd.f32 %v1448, %v1584
      %v1633 = vadd.f32 %v1449, %v1589
      %v1634 = vadd.f32 %v1450, %v1592
      %v1635 = vadd.f32 %v1451, %v1597
      %v1636 = vadd.f32 %v1452, %v1600
      %v1637 = vadd.f32 %v1453, %v1605
      %v1638 = vadd.f32 %v1454, %v1608
      %v1639 = vadd.f32 %v1455, %v1613
      %v1640 = vadd.f32 %v1456, %v1616
      %v1641 = vadd.f32 %v1457, %v1621
      %v1642 = vadd.f32 %v1458, %v1624
      %s1643 = scalar_lea.vmem %s3, 384
      %v1644 = vld [vmem:[%s1643] sm:$0xf]
      %v1645 = vld [vmem:[%s1643 + $0x4] sm:$0xf]
      %v1646 = vld [vmem:[%s1643 + $0x8] sm:$0xf]
      %v1647 = vld [vmem:[%s1643 + $0xc] sm:$0xf]
      %v1648 = vld [vmem:[%s1643 + $0x10] sm:$0xf]
      %v1649 = vld [vmem:[%s1643 + $0x14] sm:$0xf]
      %v1650 = vld [vmem:[%s1643 + $0x18] sm:$0xf]
      %v1651 = vld [vmem:[%s1643 + $0x1c] sm:$0xf]
      %v1652 = vld [vmem:[%s1643 + $0x20] sm:$0xf]
      %v1653 = vld [vmem:[%s1643 + $0x24] sm:$0xf]
      %v1654 = vld [vmem:[%s1643 + $0x28] sm:$0xf]
      %v1655 = vld [vmem:[%s1643 + $0x2c] sm:$0xf]
      %v1656 = vld [vmem:[%s1643 + $0x30] sm:$0xf]
      %v1657 = vld [vmem:[%s1643 + $0x34] sm:$0xf]
      %v1658 = vld [vmem:[%s1643 + $0x38] sm:$0xf]
      %v1659 = vld [vmem:[%s1643 + $0x3c] sm:$0xf]
      %v1676 = vunpack.c.l.b16 %v1644
      %v1677 = vunpack.c.l.b16 %v1645
      %v1678 = vunpack.c.l.b16 %v1646
      %v1679 = vunpack.c.l.b16 %v1647
      %v1680 = vunpack.c.l.b16 %v1648
      %v1681 = vunpack.c.l.b16 %v1649
      %v1682 = vunpack.c.l.b16 %v1650
      %v1683 = vunpack.c.l.b16 %v1651
      %v1684 = vunpack.c.l.b16 %v1652
      %v1685 = vunpack.c.l.b16 %v1653
      %v1686 = vunpack.c.l.b16 %v1654
      %v1687 = vunpack.c.l.b16 %v1655
      %v1688 = vunpack.c.l.b16 %v1656
      %v1689 = vunpack.c.l.b16 %v1657
      %v1690 = vunpack.c.l.b16 %v1658
      %v1691 = vunpack.c.l.b16 %v1659
      %v1692 = vpack.c.b16 %v1677, %v1676
      %v1693 = vpack.c.b16 %v1679, %v1678
      %v1694 = vpack.c.b16 %v1681, %v1680
      %v1695 = vpack.c.b16 %v1683, %v1682
      %v1696 = vpack.c.b16 %v1685, %v1684
      %v1697 = vpack.c.b16 %v1687, %v1686
      %v1698 = vpack.c.b16 %v1689, %v1688
      %v1699 = vpack.c.b16 %v1691, %v1690
      %1708 = vmatprep.subr.bf16.mxu0 0
      %1709 = vmatpush1.bf16.msra.mxu0 %v1692
      %1710 = vmatprep.subr.bf16.mxu0 0
      %1711 = vmatpush1.bf16.msra.mxu0 %v1693
      %1712 = vmatprep.subr.bf16.mxu0 0
      %1713 = vmatpush1.bf16.msra.mxu0 %v1694
      %1714 = vmatprep.subr.bf16.mxu0 0
      %1715 = vmatpush1.bf16.msra.mxu0 %v1695
      %1716 = vmatprep.subr.bf16.mxu0 0
      %1717 = vmatpush1.bf16.msra.mxu0 %v1696
      %1718 = vmatprep.subr.bf16.mxu0 0
      %1719 = vmatpush1.bf16.msra.mxu0 %v1697
      %1720 = vmatprep.subr.bf16.mxu0 0
      %1721 = vmatpush1.bf16.msra.mxu0 %v1698
      %1722 = vmatprep.subr.bf16.mxu0 0
      %1723 = vmatpush1.bf16.msra.mxu0 %v1699
      %1724 = vmatprep.subr.bf16.mxu0 0
      %1725 = vmatpush1.bf16.msra.mxu0 0
      %1726 = vmatprep.subr.bf16.mxu0 0
      %1727 = vmatpush1.bf16.msra.mxu0 0
      %1728 = vmatprep.subr.bf16.mxu0 0
      %1729 = vmatpush1.bf16.msra.mxu0 0
      %1730 = vmatprep.subr.bf16.mxu0 0
      %1731 = vmatpush1.bf16.msra.mxu0 0
      %1732 = vmatprep.subr.bf16.mxu0 0
      %1733 = vmatpush1.bf16.msra.mxu0 0
      %1734 = vmatprep.subr.bf16.mxu0 0
      %1735 = vmatpush1.bf16.msra.mxu0 0
      %1736 = vmatprep.subr.bf16.mxu0 0
      %1737 = vmatpush1.bf16.msra.mxu0 0
      %1738 = vmatprep.subr.bf16.mxu0 0
      %1739 = vmatpush1.bf16.msra.mxu0 0
      %1740 = vmatprep.mubr.bf16.mxu0 0
      %1741 = vmatmul.mubr.bf16.gmra.mrb[0].mxu0 %v320
      %v1742 = vpop.f32.mrb[0].mxu0
      %v1743 = vadd.f32 0.0, %v1742
      %v1744 = vpop.f32.mrb[0].mxu0
      %v1745 = vpop.f32.mrb[0].mxu0
      %v1746 = vadd.f32 0.0, %v1745
      %v1747 = vpop.f32.mrb[0].mxu0
      %1748 = vmatprep.mubr.bf16.mxu0 0
      %1749 = vmatmul.mubr.bf16.gmra.mrb[0].mxu0 %v322
      %v1750 = vpop.f32.mrb[0].mxu0
      %v1751 = vadd.f32 0.0, %v1750
      %v1752 = vpop.f32.mrb[0].mxu0
      %v1753 = vpop.f32.mrb[0].mxu0
      %v1754 = vadd.f32 0.0, %v1753
      %v1755 = vpop.f32.mrb[0].mxu0
      %1756 = vmatprep.mubr.bf16.mxu0 0
      %1757 = vmatmul.mubr.bf16.gmra.mrb[0].mxu0 %v324
      %v1758 = vpop.f32.mrb[0].mxu0
      %v1759 = vadd.f32 0.0, %v1758
      %v1760 = vpop.f32.mrb[0].mxu0
      %v1761 = vpop.f32.mrb[0].mxu0
      %v1762 = vadd.f32 0.0, %v1761
      %v1763 = vpop.f32.mrb[0].mxu0
      %1764 = vmatprep.mubr.bf16.mxu0 0
      %1765 = vmatmul.mubr.bf16.gmra.mrb[0].mxu0 %v326
      %v1766 = vpop.f32.mrb[0].mxu0
      %v1767 = vadd.f32 0.0, %v1766
      %v1768 = vpop.f32.mrb[0].mxu0
      %v1769 = vpop.f32.mrb[0].mxu0
      %v1770 = vadd.f32 0.0, %v1769
      %v1771 = vpop.f32.mrb[0].mxu0
      %1772 = vmatprep.mubr.bf16.mxu0 0
      %1773 = vmatmul.mubr.bf16.gmra.mrb[0].mxu0 %v328
      %v1774 = vpop.f32.mrb[0].mxu0
      %v1775 = vadd.f32 0.0, %v1774
      %v1776 = vpop.f32.mrb[0].mxu0
      %v1777 = vpop.f32.mrb[0].mxu0
      %v1778 = vadd.f32 0.0, %v1777
      %v1779 = vpop.f32.mrb[0].mxu0
      %1780 = vmatprep.mubr.bf16.mxu0 0
      %1781 = vmatmul.mubr.bf16.gmra.mrb[0].mxu0 %v330
      %v1782 = vpop.f32.mrb[0].mxu0
      %v1783 = vadd.f32 0.0, %v1782
      %v1784 = vpop.f32.mrb[0].mxu0
      %v1785 = vpop.f32.mrb[0].mxu0
      %v1786 = vadd.f32 0.0, %v1785
      %v1787 = vpop.f32.mrb[0].mxu0
      %1788 = vmatprep.mubr.bf16.mxu0 0
      %1789 = vmatmul.mubr.bf16.gmra.mrb[0].mxu0 %v332
      %v1790 = vpop.f32.mrb[0].mxu0
      %v1791 = vadd.f32 0.0, %v1790
      %v1792 = vpop.f32.mrb[0].mxu0
      %v1793 = vpop.f32.mrb[0].mxu0
      %v1794 = vadd.f32 0.0, %v1793
      %v1795 = vpop.f32.mrb[0].mxu0
      %1796 = vmatprep.mubr.bf16.mxu0 0
      %1797 = vmatmul.mubr.bf16.gmra.mrb[0].mxu0 %v334
      %v1798 = vpop.f32.mrb[0].mxu0
      %v1799 = vadd.f32 0.0, %v1798
      %v1800 = vpop.f32.mrb[0].mxu0
      %v1801 = vpop.f32.mrb[0].mxu0
      %v1802 = vadd.f32 0.0, %v1801
      %v1803 = vpop.f32.mrb[0].mxu0
      %1804 = vdwg.mxu0
      %v1805 = vadd.f32 %v1627, %v1743
      %v1806 = vadd.f32 %v1628, %v1746
      %v1807 = vadd.f32 %v1629, %v1751
      %v1808 = vadd.f32 %v1630, %v1754
      %v1809 = vadd.f32 %v1631, %v1759
      %v1810 = vadd.f32 %v1632, %v1762
      %v1811 = vadd.f32 %v1633, %v1767
      %v1812 = vadd.f32 %v1634, %v1770
      %v1813 = vadd.f32 %v1635, %v1775
      %v1814 = vadd.f32 %v1636, %v1778
      %v1815 = vadd.f32 %v1637, %v1783
      %v1816 = vadd.f32 %v1638, %v1786
      %v1817 = vadd.f32 %v1639, %v1791
      %v1818 = vadd.f32 %v1640, %v1794
      %v1819 = vadd.f32 %v1641, %v1799
      %v1820 = vadd.f32 %v1642, %v1802
      %v1822 = vshrl.u32 %v334, 16
      %v1824 = vshll.u32 %v334, 16
      %v1826 = vrot.slane %v1824, 1
      %v1827 = vor.u32 %v1822, %v1826
      %v1829 = vshll.u32 %v335, 16
      %v1831 = vrot.slane %v1829, 1
      %v1832 = vsel %vm451, %v1827, %v1831
      %s1834 = scalar_lea.vmem %s3, 448
      %v1835 = vld [vmem:[%s1834] sm:$0xf]
      %v1836 = vld [vmem:[%s1834 + $0x4] sm:$0xf]
      %v1837 = vld [vmem:[%s1834 + $0x8] sm:$0xf]
      %v1838 = vld [vmem:[%s1834 + $0xc] sm:$0xf]
      %v1839 = vld [vmem:[%s1834 + $0x10] sm:$0xf]
      %v1840 = vld [vmem:[%s1834 + $0x14] sm:$0xf]
      %v1841 = vld [vmem:[%s1834 + $0x18] sm:$0xf]
      %v1842 = vld [vmem:[%s1834 + $0x1c] sm:$0xf]
      %v1843 = vld [vmem:[%s1834 + $0x20] sm:$0xf]
      %v1844 = vld [vmem:[%s1834 + $0x24] sm:$0xf]
      %v1845 = vld [vmem:[%s1834 + $0x28] sm:$0xf]
      %v1846 = vld [vmem:[%s1834 + $0x2c] sm:$0xf]
      %v1847 = vld [vmem:[%s1834 + $0x30] sm:$0xf]
      %v1848 = vld [vmem:[%s1834 + $0x34] sm:$0xf]
      %v1849 = vld [vmem:[%s1834 + $0x38] sm:$0xf]
      %v1850 = vld [vmem:[%s1834 + $0x3c] sm:$0xf]
      %v1867 = vunpack.c.l.b16 %v1835
      %v1868 = vunpack.c.l.b16 %v1836
      %v1869 = vunpack.c.l.b16 %v1837
      %v1870 = vunpack.c.l.b16 %v1838
      %v1871 = vunpack.c.l.b16 %v1839
      %v1872 = vunpack.c.l.b16 %v1840
      %v1873 = vunpack.c.l.b16 %v1841
      %v1874 = vunpack.c.l.b16 %v1842
      %v1875 = vunpack.c.l.b16 %v1843
      %v1876 = vunpack.c.l.b16 %v1844
      %v1877 = vunpack.c.l.b16 %v1845
      %v1878 = vunpack.c.l.b16 %v1846
      %v1879 = vunpack.c.l.b16 %v1847
      %v1880 = vunpack.c.l.b16 %v1848
      %v1881 = vunpack.c.l.b16 %v1849
      %v1882 = vunpack.c.l.b16 %v1850
      %v1883 = vpack.c.b16 %v1868, %v1867
      %v1884 = vpack.c.b16 %v1870, %v1869
      %v1885 = vpack.c.b16 %v1872, %v1871
      %v1886 = vpack.c.b16 %v1874, %v1873
      %v1887 = vpack.c.b16 %v1876, %v1875
      %v1888 = vpack.c.b16 %v1878, %v1877
      %v1889 = vpack.c.b16 %v1880, %v1879
      %v1890 = vpack.c.b16 %v1882, %v1881
      %1899 = vmatprep.subr.bf16.mxu0 0
      %1900 = vmatpush1.bf16.msra.mxu0 %v1883
      %1901 = vmatprep.subr.bf16.mxu0 0
      %1902 = vmatpush1.bf16.msra.mxu0 %v1884
      %1903 = vmatprep.subr.bf16.mxu0 0
      %1904 = vmatpush1.bf16.msra.mxu0 %v1885
      %1905 = vmatprep.subr.bf16.mxu0 0
      %1906 = vmatpush1.bf16.msra.mxu0 %v1886
      %1907 = vmatprep.subr.bf16.mxu0 0
      %1908 = vmatpush1.bf16.msra.mxu0 %v1887
      %1909 = vmatprep.subr.bf16.mxu0 0
      %1910 = vmatpush1.bf16.msra.mxu0 %v1888
      %1911 = vmatprep.subr.bf16.mxu0 0
      %1912 = vmatpush1.bf16.msra.mxu0 %v1889
      %1913 = vmatprep.subr.bf16.mxu0 0
      %1914 = vmatpush1.bf16.msra.mxu0 %v1890
      %1915 = vmatprep.subr.bf16.mxu0 0
      %1916 = vmatpush1.bf16.msra.mxu0 0
      %1917 = vmatprep.subr.bf16.mxu0 0
      %1918 = vmatpush1.bf16.msra.mxu0 0
      %1919 = vmatprep.subr.bf16.mxu0 0
      %1920 = vmatpush1.bf16.msra.mxu0 0
      %1921 = vmatprep.subr.bf16.mxu0 0
      %1922 = vmatpush1.bf16.msra.mxu0 0
      %1923 = vmatprep.subr.bf16.mxu0 0
      %1924 = vmatpush1.bf16.msra.mxu0 0
      %1925 = vmatprep.subr.bf16.mxu0 0
      %1926 = vmatpush1.bf16.msra.mxu0 0
      %1927 = vmatprep.subr.bf16.mxu0 0
      %1928 = vmatpush1.bf16.msra.mxu0 0
      %1929 = vmatprep.subr.bf16.mxu0 0
      %1930 = vmatpush1.bf16.msra.mxu0 0
      %1931 = vmatprep.mubr.bf16.mxu0 0
      %1932 = vmatmul.mubr.bf16.gmra.mrb[0].mxu0 %v487
      %v1933 = vpop.f32.mrb[0].mxu0
      %v1934 = vadd.f32 0.0, %v1933
      %v1935 = vpop.f32.mrb[0].mxu0
      %v1936 = vpop.f32.mrb[0].mxu0
      %v1937 = vadd.f32 0.0, %v1936
      %v1938 = vpop.f32.mrb[0].mxu0
      %1939 = vmatprep.mubr.bf16.mxu0 0
      %1940 = vmatmul.mubr.bf16.gmra.mrb[0].mxu0 %v499
      %v1941 = vpop.f32.mrb[0].mxu0
      %v1942 = vadd.f32 0.0, %v1941
      %v1943 = vpop.f32.mrb[0].mxu0
      %v1944 = vpop.f32.mrb[0].mxu0
      %v1945 = vadd.f32 0.0, %v1944
      %v1946 = vpop.f32.mrb[0].mxu0
      %1947 = vmatprep.mubr.bf16.mxu0 0
      %1948 = vmatmul.mubr.bf16.gmra.mrb[0].mxu0 %v511
      %v1949 = vpop.f32.mrb[0].mxu0
      %v1950 = vadd.f32 0.0, %v1949
      %v1951 = vpop.f32.mrb[0].mxu0
      %v1952 = vpop.f32.mrb[0].mxu0
      %v1953 = vadd.f32 0.0, %v1952
      %v1954 = vpop.f32.mrb[0].mxu0
      %1955 = vmatprep.mubr.bf16.mxu0 0
      %1956 = vmatmul.mubr.bf16.gmra.mrb[0].mxu0 %v523
      %v1957 = vpop.f32.mrb[0].mxu0
      %v1958 = vadd.f32 0.0, %v1957
      %v1959 = vpop.f32.mrb[0].mxu0
      %v1960 = vpop.f32.mrb[0].mxu0
      %v1961 = vadd.f32 0.0, %v1960
      %v1962 = vpop.f32.mrb[0].mxu0
      %1963 = vmatprep.mubr.bf16.mxu0 0
      %1964 = vmatmul.mubr.bf16.gmra.mrb[0].mxu0 %v535
      %v1965 = vpop.f32.mrb[0].mxu0
      %v1966 = vadd.f32 0.0, %v1965
      %v1967 = vpop.f32.mrb[0].mxu0
      %v1968 = vpop.f32.mrb[0].mxu0
      %v1969 = vadd.f32 0.0, %v1968
      %v1970 = vpop.f32.mrb[0].mxu0
      %1971 = vmatprep.mubr.bf16.mxu0 0
      %1972 = vmatmul.mubr.bf16.gmra.mrb[0].mxu0 %v547
      %v1973 = vpop.f32.mrb[0].mxu0
      %v1974 = vadd.f32 0.0, %v1973
      %v1975 = vpop.f32.mrb[0].mxu0
      %v1976 = vpop.f32.mrb[0].mxu0
      %v1977 = vadd.f32 0.0, %v1976
      %v1978 = vpop.f32.mrb[0].mxu0
      %1979 = vmatprep.mubr.bf16.mxu0 0
      %1980 = vmatmul.mubr.bf16.gmra.mrb[0].mxu0 %v1279
      %v1981 = vpop.f32.mrb[0].mxu0
      %v1982 = vadd.f32 0.0, %v1981
      %v1983 = vpop.f32.mrb[0].mxu0
      %v1984 = vpop.f32.mrb[0].mxu0
      %v1985 = vadd.f32 0.0, %v1984
      %v1986 = vpop.f32.mrb[0].mxu0
      %1987 = vmatprep.mubr.bf16.mxu0 0
      %1988 = vmatmul.mubr.bf16.gmra.mrb[0].mxu0 %v1832
      %v1989 = vpop.f32.mrb[0].mxu0
      %v1990 = vadd.f32 0.0, %v1989
      %v1991 = vpop.f32.mrb[0].mxu0
      %v1992 = vpop.f32.mrb[0].mxu0
      %v1993 = vadd.f32 0.0, %v1992
      %v1994 = vpop.f32.mrb[0].mxu0
      %1995 = vdwg.mxu0
      %v1996 = vadd.f32 %v1805, %v1934
      %v1997 = vadd.f32 %v1806, %v1937
      %v1998 = vadd.f32 %v1807, %v1942
      %v1999 = vadd.f32 %v1808, %v1945
      %v2000 = vadd.f32 %v1809, %v1950
      %v2001 = vadd.f32 %v1810, %v1953
      %v2002 = vadd.f32 %v1811, %v1958
      %v2003 = vadd.f32 %v1812, %v1961
      %v2004 = vadd.f32 %v1813, %v1966
      %v2005 = vadd.f32 %v1814, %v1969
      %v2006 = vadd.f32 %v1815, %v1974
      %v2007 = vadd.f32 %v1816, %v1977
      %v2008 = vadd.f32 %v1817, %v1982
      %v2009 = vadd.f32 %v1818, %v1985
      %v2010 = vadd.f32 %v1819, %v1990
      %v2011 = vadd.f32 %v1820, %v1993
      %v2014 = vrot.slane %v334, 1
      %v2015 = vrot.slane %v335, 1
      %v2016 = vsel %vm879, %v2014, %v2015
      %s2018 = scalar_lea.vmem %s3, 512
      %v2019 = vld [vmem:[%s2018] sm:$0xf]
      %v2020 = vld [vmem:[%s2018 + $0x4] sm:$0xf]
      %v2021 = vld [vmem:[%s2018 + $0x8] sm:$0xf]
      %v2022 = vld [vmem:[%s2018 + $0xc] sm:$0xf]
      %v2023 = vld [vmem:[%s2018 + $0x10] sm:$0xf]
      %v2024 = vld [vmem:[%s2018 + $0x14] sm:$0xf]
      %v2025 = vld [vmem:[%s2018 + $0x18] sm:$0xf]
      %v2026 = vld [vmem:[%s2018 + $0x1c] sm:$0xf]
      %v2027 = vld [vmem:[%s2018 + $0x20] sm:$0xf]
      %v2028 = vld [vmem:[%s2018 + $0x24] sm:$0xf]
      %v2029 = vld [vmem:[%s2018 + $0x28] sm:$0xf]
      %v2030 = vld [vmem:[%s2018 + $0x2c] sm:$0xf]
      %v2031 = vld [vmem:[%s2018 + $0x30] sm:$0xf]
      %v2032 = vld [vmem:[%s2018 + $0x34] sm:$0xf]
      %v2033 = vld [vmem:[%s2018 + $0x38] sm:$0xf]
      %v2034 = vld [vmem:[%s2018 + $0x3c] sm:$0xf]
      %v2051 = vunpack.c.l.b16 %v2019
      %v2052 = vunpack.c.l.b16 %v2020
      %v2053 = vunpack.c.l.b16 %v2021
      %v2054 = vunpack.c.l.b16 %v2022
      %v2055 = vunpack.c.l.b16 %v2023
      %v2056 = vunpack.c.l.b16 %v2024
      %v2057 = vunpack.c.l.b16 %v2025
      %v2058 = vunpack.c.l.b16 %v2026
      %v2059 = vunpack.c.l.b16 %v2027
      %v2060 = vunpack.c.l.b16 %v2028
      %v2061 = vunpack.c.l.b16 %v2029
      %v2062 = vunpack.c.l.b16 %v2030
      %v2063 = vunpack.c.l.b16 %v2031
      %v2064 = vunpack.c.l.b16 %v2032
      %v2065 = vunpack.c.l.b16 %v2033
      %v2066 = vunpack.c.l.b16 %v2034
      %v2067 = vpack.c.b16 %v2052, %v2051
      %v2068 = vpack.c.b16 %v2054, %v2053
      %v2069 = vpack.c.b16 %v2056, %v2055
      %v2070 = vpack.c.b16 %v2058, %v2057
      %v2071 = vpack.c.b16 %v2060, %v2059
      %v2072 = vpack.c.b16 %v2062, %v2061
      %v2073 = vpack.c.b16 %v2064, %v2063
      %v2074 = vpack.c.b16 %v2066, %v2065
      %2083 = vmatprep.subr.bf16.mxu0 0
      %2084 = vmatpush1.bf16.msra.mxu0 %v2067
      %2085 = vmatprep.subr.bf16.mxu0 0
      %2086 = vmatpush1.bf16.msra.mxu0 %v2068
      %2087 = vmatprep.subr.bf16.mxu0 0
      %2088 = vmatpush1.bf16.msra.mxu0 %v2069
      %2089 = vmatprep.subr.bf16.mxu0 0
      %2090 = vmatpush1.bf16.msra.mxu0 %v2070
      %2091 = vmatprep.subr.bf16.mxu0 0
      %2092 = vmatpush1.bf16.msra.mxu0 %v2071
      %2093 = vmatprep.subr.bf16.mxu0 0
      %2094 = vmatpush1.bf16.msra.mxu0 %v2072
      %2095 = vmatprep.subr.bf16.mxu0 0
      %2096 = vmatpush1.bf16.msra.mxu0 %v2073
      %2097 = vmatprep.subr.bf16.mxu0 0
      %2098 = vmatpush1.bf16.msra.mxu0 %v2074
      %2099 = vmatprep.subr.bf16.mxu0 0
      %2100 = vmatpush1.bf16.msra.mxu0 0
      %2101 = vmatprep.subr.bf16.mxu0 0
      %2102 = vmatpush1.bf16.msra.mxu0 0
      %2103 = vmatprep.subr.bf16.mxu0 0
      %2104 = vmatpush1.bf16.msra.mxu0 0
      %2105 = vmatprep.subr.bf16.mxu0 0
      %2106 = vmatpush1.bf16.msra.mxu0 0
      %2107 = vmatprep.subr.bf16.mxu0 0
      %2108 = vmatpush1.bf16.msra.mxu0 0
      %2109 = vmatprep.subr.bf16.mxu0 0
      %2110 = vmatpush1.bf16.msra.mxu0 0
      %2111 = vmatprep.subr.bf16.mxu0 0
      %2112 = vmatpush1.bf16.msra.mxu0 0
      %2113 = vmatprep.subr.bf16.mxu0 0
      %2114 = vmatpush1.bf16.msra.mxu0 0
      %2115 = vmatprep.mubr.bf16.mxu0 0
      %2116 = vmatmul.mubr.bf16.gmra.mrb[0].mxu0 %v888
      %v2117 = vpop.f32.mrb[0].mxu0
      %v2118 = vadd.f32 0.0, %v2117
      %v2119 = vpop.f32.mrb[0].mxu0
      %v2120 = vpop.f32.mrb[0].mxu0
      %v2121 = vadd.f32 0.0, %v2120
      %v2122 = vpop.f32.mrb[0].mxu0
      %2123 = vmatprep.mubr.bf16.mxu0 0
      %2124 = vmatmul.mubr.bf16.gmra.mrb[0].mxu0 %v891
      %v2125 = vpop.f32.mrb[0].mxu0
      %v2126 = vadd.f32 0.0, %v2125
      %v2127 = vpop.f32.mrb[0].mxu0
      %v2128 = vpop.f32.mrb[0].mxu0
      %v2129 = vadd.f32 0.0, %v2128
      %v2130 = vpop.f32.mrb[0].mxu0
      %2131 = vmatprep.mubr.bf16.mxu0 0
      %2132 = vmatmul.mubr.bf16.gmra.mrb[0].mxu0 %v894
      %v2133 = vpop.f32.mrb[0].mxu0
      %v2134 = vadd.f32 0.0, %v2133
      %v2135 = vpop.f32.mrb[0].mxu0
      %v2136 = vpop.f32.mrb[0].mxu0
      %v2137 = vadd.f32 0.0, %v2136
      %v2138 = vpop.f32.mrb[0].mxu0
      %2139 = vmatprep.mubr.bf16.mxu0 0
      %2140 = vmatmul.mubr.bf16.gmra.mrb[0].mxu0 %v897
      %v2141 = vpop.f32.mrb[0].mxu0
      %v2142 = vadd.f32 0.0, %v2141
      %v2143 = vpop.f32.mrb[0].mxu0
      %v2144 = vpop.f32.mrb[0].mxu0
      %v2145 = vadd.f32 0.0, %v2144
      %v2146 = vpop.f32.mrb[0].mxu0
      %2147 = vmatprep.mubr.bf16.mxu0 0
      %2148 = vmatmul.mubr.bf16.gmra.mrb[0].mxu0 %v900
      %v2149 = vpop.f32.mrb[0].mxu0
      %v2150 = vadd.f32 0.0, %v2149
      %v2151 = vpop.f32.mrb[0].mxu0
      %v2152 = vpop.f32.mrb[0].mxu0
      %v2153 = vadd.f32 0.0, %v2152
      %v2154 = vpop.f32.mrb[0].mxu0
      %2155 = vmatprep.mubr.bf16.mxu0 0
      %2156 = vmatmul.mubr.bf16.gmra.mrb[0].mxu0 %v903
      %v2157 = vpop.f32.mrb[0].mxu0
      %v2158 = vadd.f32 0.0, %v2157
      %v2159 = vpop.f32.mrb[0].mxu0
      %v2160 = vpop.f32.mrb[0].mxu0
      %v2161 = vadd.f32 0.0, %v2160
      %v2162 = vpop.f32.mrb[0].mxu0
      %2163 = vmatprep.mubr.bf16.mxu0 0
      %2164 = vmatmul.mubr.bf16.gmra.mrb[0].mxu0 %v1463
      %v2165 = vpop.f32.mrb[0].mxu0
      %v2166 = vadd.f32 0.0, %v2165
      %v2167 = vpop.f32.mrb[0].mxu0
      %v2168 = vpop.f32.mrb[0].mxu0
      %v2169 = vadd.f32 0.0, %v2168
      %v2170 = vpop.f32.mrb[0].mxu0
      %2171 = vmatprep.mubr.bf16.mxu0 0
      %2172 = vmatmul.mubr.bf16.gmra.mrb[0].mxu0 %v2016
      %v2173 = vpop.f32.mrb[0].mxu0
      %v2174 = vadd.f32 0.0, %v2173
      %v2175 = vpop.f32.mrb[0].mxu0
      %v2176 = vpop.f32.mrb[0].mxu0
      %v2177 = vadd.f32 0.0, %v2176
      %v2178 = vpop.f32.mrb[0].mxu0
      %2179 = vdwg.mxu0
      %v2180 = vadd.f32 %v1996, %v2118
      %v2181 = vadd.f32 %v1997, %v2121
      %v2182 = vadd.f32 %v1998, %v2126
      %v2183 = vadd.f32 %v1999, %v2129
      %v2184 = vadd.f32 %v2000, %v2134
      %v2185 = vadd.f32 %v2001, %v2137
      %v2186 = vadd.f32 %v2002, %v2142
      %v2187 = vadd.f32 %v2003, %v2145
      %v2188 = vadd.f32 %v2004, %v2150
      %v2189 = vadd.f32 %v2005, %v2153
      %v2190 = vadd.f32 %v2006, %v2158
      %v2191 = vadd.f32 %v2007, %v2161
      %v2192 = vadd.f32 %v2008, %v2166
      %v2193 = vadd.f32 %v2009, %v2169
      %v2194 = vadd.f32 %v2010, %v2174
      %v2195 = vadd.f32 %v2011, %v2177
      %v2196 = vld [vmem:[%s4] sm:$0x1]
      %v2198 = vlaneseq
      %v2199 = vshrl.u32 %v2198, 7
      %v2200 = vsub.s32 0, %v2199
      %v2201 = vrot.slane %v2196, %v2200
      %v2203 = vadd.f32 %v2180, %v2201
      %v2204 = vadd.f32 %v2181, %v2201
      %v2205 = vadd.f32 %v2182, %v2201
      %v2206 = vadd.f32 %v2183, %v2201
      %v2207 = vadd.f32 %v2184, %v2201
      %v2208 = vadd.f32 %v2185, %v2201
      %v2209 = vadd.f32 %v2186, %v2201
      %v2210 = vadd.f32 %v2187, %v2201
      %v2211 = vadd.f32 %v2188, %v2201
      %v2212 = vadd.f32 %v2189, %v2201
      %v2213 = vadd.f32 %v2190, %v2201
      %v2214 = vadd.f32 %v2191, %v2201
      %v2215 = vadd.f32 %v2192, %v2201
      %v2216 = vadd.f32 %v2193, %v2201
      %v2217 = vadd.f32 %v2194, %v2201
      %v2218 = vadd.f32 %v2195, %v2201
      %v2219 = vld [vmem:[#allocation2] sm:$0x1]
      %v2220 = vadd.f32 %v2203, %v2204
      %v2221 = vadd.f32 %v2220, %v2205
      %v2222 = vadd.f32 %v2221, %v2206
      %v2223 = vadd.f32 %v2222, %v2207
      %v2224 = vadd.f32 %v2223, %v2208
      %v2225 = vadd.f32 %v2224, %v2209
      %v2226 = vadd.f32 %v2225, %v2210
      %v2227 = vadd.f32 %v2226, %v2211
      %v2228 = vadd.f32 %v2227, %v2212
      %v2229 = vadd.f32 %v2228, %v2213
      %v2230 = vadd.f32 %v2229, %v2214
      %v2231 = vadd.f32 %v2230, %v2215
      %v2232 = vadd.f32 %v2231, %v2216
      %v2233 = vadd.f32 %v2232, %v2217
      %v2234 = vadd.f32 %v2233, %v2218
      %v2235 = vrot.slane %v2234, 4
      %v2236 = vadd.f32 %v2234, %v2235
      %v2237 = vrot.slane %v2236, 2
      %v2238 = vadd.f32 %v2236, %v2237
      %v2239 = vrot.slane %v2238, 1
      %v2240 = vadd.f32 %v2238, %v2239
      %v2241 = vadd.f32 %v2219, %v2240
      %2242 = vst [vmem:[#allocation2] sm:$0x1] %v2241
      %v2243 = vld [vmem:[#allocation3] sm:$0x1]
      %v2244 = vmul.f32 %v2203, %v2203
      %v2245 = vmul.f32 %v2204, %v2204
      %v2246 = vmul.f32 %v2205, %v2205
      %v2247 = vmul.f32 %v2206, %v2206
      %v2248 = vmul.f32 %v2207, %v2207
      %v2249 = vmul.f32 %v2208, %v2208
      %v2250 = vmul.f32 %v2209, %v2209
      %v2251 = vmul.f32 %v2210, %v2210
      %v2252 = vmul.f32 %v2211, %v2211
      %v2253 = vmul.f32 %v2212, %v2212
      %v2254 = vmul.f32 %v2213, %v2213
      %v2255 = vmul.f32 %v2214, %v2214
      %v2256 = vmul.f32 %v2215, %v2215
      %v2257 = vmul.f32 %v2216, %v2216
      %v2258 = vmul.f32 %v2217, %v2217
      %v2259 = vmul.f32 %v2218, %v2218
      %v2260 = vadd.f32 %v2244, %v2245
      %v2261 = vadd.f32 %v2260, %v2246
      %v2262 = vadd.f32 %v2261, %v2247
      %v2263 = vadd.f32 %v2262, %v2248
      %v2264 = vadd.f32 %v2263, %v2249
      %v2265 = vadd.f32 %v2264, %v2250
      %v2266 = vadd.f32 %v2265, %v2251
      %v2267 = vadd.f32 %v2266, %v2252
      %v2268 = vadd.f32 %v2267, %v2253
      %v2269 = vadd.f32 %v2268, %v2254
      %v2270 = vadd.f32 %v2269, %v2255
      %v2271 = vadd.f32 %v2270, %v2256
      %v2272 = vadd.f32 %v2271, %v2257
      %v2273 = vadd.f32 %v2272, %v2258
      %v2274 = vadd.f32 %v2273, %v2259
      %v2275 = vrot.slane %v2274, 4
      %v2276 = vadd.f32 %v2274, %v2275
      %v2277 = vrot.slane %v2276, 2
      %v2278 = vadd.f32 %v2276, %v2277
      %v2279 = vrot.slane %v2278, 1
      %v2280 = vadd.f32 %v2278, %v2279
      %v2281 = vadd.f32 %v2243, %v2280
      %2282 = vst [vmem:[#allocation3] sm:$0x1] %v2281
      %s2283 = scalar_lea.vmem %s278, %s336
      %2284 = vst [vmem:[%s2283] sm:$0xff] %v2203
      %2285 = vst [vmem:[%s2283 + $0x8] sm:$0xff] %v2204
      %2286 = vst [vmem:[%s2283 + $0x10] sm:$0xff] %v2205
      %2287 = vst [vmem:[%s2283 + $0x18] sm:$0xff] %v2206
      %2288 = vst [vmem:[%s2283 + $0x20] sm:$0xff] %v2207
      %2289 = vst [vmem:[%s2283 + $0x28] sm:$0xff] %v2208
      %2290 = vst [vmem:[%s2283 + $0x30] sm:$0xff] %v2209
      %2291 = vst [vmem:[%s2283 + $0x38] sm:$0xff] %v2210
      %2292 = vst [vmem:[%s2283 + $0x40] sm:$0xff] %v2211
      %2293 = vst [vmem:[%s2283 + $0x48] sm:$0xff] %v2212
      %2294 = vst [vmem:[%s2283 + $0x50] sm:$0xff] %v2213
      %2295 = vst [vmem:[%s2283 + $0x58] sm:$0xff] %v2214
      %2296 = vst [vmem:[%s2283 + $0x60] sm:$0xff] %v2215
      %2297 = vst [vmem:[%s2283 + $0x68] sm:$0xff] %v2216
      %2298 = vst [vmem:[%s2283 + $0x70] sm:$0xff] %v2217
      %2299 = vst [vmem:[%s2283 + $0x78] sm:$0xff] %v2218
      %p2300 = scmp.eq.s32.totalorder %s21, 1
      // Predicated region
      $region45: #{fine_adain_res_blocks.2} parent=39 // pred_check
        %p2301 = pneg %p2300
      $region46: #{fine_adain_res_blocks.2} parent=39 // pred_check_branch
        %2303 = sbr.rel (%p2301) target = $region48
      $region47: #{fine_adain_res_blocks.2} parent=39 // pred_region
        %v2304 = vld [vmem:[#allocation2] sm:$0x1]
        %v2305 = vmul.f32 %v2304, 0.00390625
        %v2306 = vld [vmem:[#allocation3] sm:$0x1]
        %v2307 = vmul.f32 %v2306, 0.00390625
        %v2308 = vmul.f32 %v2305, %v2305
        %v2309 = vsub.f32 %v2307, %v2308
        %v2310 = vmax.f32 %v2309, 0.0
        %v2311 = vadd.f32 %v2310, 1e-05
        %v2312 = vrsqrt.pop %v2311
        %v2313 = vld [vmem:[%s270] sm:$0x1]
        %v2314 = vmul.f32 %v2313, %v2312
        %v2315 = vld [vmem:[%s273] sm:$0x1]
        %v2316 = vmul.f32 %v2305, %v2314
        %v2317 = vsub.f32 %v2315, %v2316
        %v2318 = vld [vmem:[%s278] sm:$0xff]
        %v2319 = vld [vmem:[%s278 + $0x8] sm:$0xff]
        %v2320 = vld [vmem:[%s278 + $0x10] sm:$0xff]
        %v2321 = vld [vmem:[%s278 + $0x18] sm:$0xff]
        %v2322 = vld [vmem:[%s278 + $0x20] sm:$0xff]
        %v2323 = vld [vmem:[%s278 + $0x28] sm:$0xff]
        %v2324 = vld [vmem:[%s278 + $0x30] sm:$0xff]
        %v2325 = vld [vmem:[%s278 + $0x38] sm:$0xff]
        %v2326 = vld [vmem:[%s278 + $0x40] sm:$0xff]
        %v2327 = vld [vmem:[%s278 + $0x48] sm:$0xff]
        %v2328 = vld [vmem:[%s278 + $0x50] sm:$0xff]
        %v2329 = vld [vmem:[%s278 + $0x58] sm:$0xff]
        %v2330 = vld [vmem:[%s278 + $0x60] sm:$0xff]
        %v2331 = vld [vmem:[%s278 + $0x68] sm:$0xff]
        %v2332 = vld [vmem:[%s278 + $0x70] sm:$0xff]
        %v2333 = vld [vmem:[%s278 + $0x78] sm:$0xff]
        %v2334 = vld [vmem:[%s278 + $0x80] sm:$0xff]
        %v2335 = vld [vmem:[%s278 + $0x88] sm:$0xff]
        %v2336 = vld [vmem:[%s278 + $0x90] sm:$0xff]
        %v2337 = vld [vmem:[%s278 + $0x98] sm:$0xff]
        %v2338 = vld [vmem:[%s278 + $0xa0] sm:$0xff]
        %v2339 = vld [vmem:[%s278 + $0xa8] sm:$0xff]
        %v2340 = vld [vmem:[%s278 + $0xb0] sm:$0xff]
        %v2341 = vld [vmem:[%s278 + $0xb8] sm:$0xff]
        %v2342 = vld [vmem:[%s278 + $0xc0] sm:$0xff]
        %v2343 = vld [vmem:[%s278 + $0xc8] sm:$0xff]
        %v2344 = vld [vmem:[%s278 + $0xd0] sm:$0xff]
        %v2345 = vld [vmem:[%s278 + $0xd8] sm:$0xff]
        %v2346 = vld [vmem:[%s278 + $0xe0] sm:$0xff]
        %v2347 = vld [vmem:[%s278 + $0xe8] sm:$0xff]
        %v2348 = vld [vmem:[%s278 + $0xf0] sm:$0xff]
        %v2349 = vld [vmem:[%s278 + $0xf8] sm:$0xff]
        %v2351 = vlaneseq
        %v2352 = vshrl.u32 %v2351, 7
        %v2353 = vsub.s32 0, %v2352
        %v2354 = vrot.slane %v2314, %v2353
        %v2356 = vmul.f32 %v2318, %v2354
        %v2357 = vmul.f32 %v2319, %v2354
        %v2358 = vmul.f32 %v2320, %v2354
        %v2359 = vmul.f32 %v2321, %v2354
        %v2360 = vmul.f32 %v2322, %v2354
        %v2361 = vmul.f32 %v2323, %v2354
        %v2362 = vmul.f32 %v2324, %v2354
        %v2363 = vmul.f32 %v2325, %v2354
        %v2364 = vmul.f32 %v2326, %v2354
        %v2365 = vmul.f32 %v2327, %v2354
        %v2366 = vmul.f32 %v2328, %v2354
        %v2367 = vmul.f32 %v2329, %v2354
        %v2368 = vmul.f32 %v2330, %v2354
        %v2369 = vmul.f32 %v2331, %v2354
        %v2370 = vmul.f32 %v2332, %v2354
        %v2371 = vmul.f32 %v2333, %v2354
        %v2372 = vmul.f32 %v2334, %v2354
        %v2373 = vmul.f32 %v2335, %v2354
        %v2374 = vmul.f32 %v2336, %v2354
        %v2375 = vmul.f32 %v2337, %v2354
        %v2376 = vmul.f32 %v2338, %v2354
        %v2377 = vmul.f32 %v2339, %v2354
        %v2378 = vmul.f32 %v2340, %v2354
        %v2379 = vmul.f32 %v2341, %v2354
        %v2380 = vmul.f32 %v2342, %v2354
        %v2381 = vmul.f32 %v2343, %v2354
        %v2382 = vmul.f32 %v2344, %v2354
        %v2383 = vmul.f32 %v2345, %v2354
        %v2384 = vmul.f32 %v2346, %v2354
        %v2385 = vmul.f32 %v2347, %v2354
        %v2386 = vmul.f32 %v2348, %v2354
        %v2387 = vmul.f32 %v2349, %v2354
        %v2389 = vlaneseq
        %v2390 = vshrl.u32 %v2389, 7
        %v2391 = vsub.s32 0, %v2390
        %v2392 = vrot.slane %v2317, %v2391
        %v2394 = vadd.f32 %v2356, %v2392
        %v2395 = vadd.f32 %v2357, %v2392
        %v2396 = vadd.f32 %v2358, %v2392
        %v2397 = vadd.f32 %v2359, %v2392
        %v2398 = vadd.f32 %v2360, %v2392
        %v2399 = vadd.f32 %v2361, %v2392
        %v2400 = vadd.f32 %v2362, %v2392
        %v2401 = vadd.f32 %v2363, %v2392
        %v2402 = vadd.f32 %v2364, %v2392
        %v2403 = vadd.f32 %v2365, %v2392
        %v2404 = vadd.f32 %v2366, %v2392
        %v2405 = vadd.f32 %v2367, %v2392
        %v2406 = vadd.f32 %v2368, %v2392
        %v2407 = vadd.f32 %v2369, %v2392
        %v2408 = vadd.f32 %v2370, %v2392
        %v2409 = vadd.f32 %v2371, %v2392
        %v2410 = vadd.f32 %v2372, %v2392
        %v2411 = vadd.f32 %v2373, %v2392
        %v2412 = vadd.f32 %v2374, %v2392
        %v2413 = vadd.f32 %v2375, %v2392
        %v2414 = vadd.f32 %v2376, %v2392
        %v2415 = vadd.f32 %v2377, %v2392
        %v2416 = vadd.f32 %v2378, %v2392
        %v2417 = vadd.f32 %v2379, %v2392
        %v2418 = vadd.f32 %v2380, %v2392
        %v2419 = vadd.f32 %v2381, %v2392
        %v2420 = vadd.f32 %v2382, %v2392
        %v2421 = vadd.f32 %v2383, %v2392
        %v2422 = vadd.f32 %v2384, %v2392
        %v2423 = vadd.f32 %v2385, %v2392
        %v2424 = vadd.f32 %v2386, %v2392
        %v2425 = vadd.f32 %v2387, %v2392
        %v2426 = vld [vmem:[#allocation4] sm:$0xff]
        %v2427 = vld [vmem:[#allocation4 + $0x8] sm:$0xff]
        %v2428 = vld [vmem:[#allocation4 + $0x10] sm:$0xff]
        %v2429 = vld [vmem:[#allocation4 + $0x18] sm:$0xff]
        %v2430 = vld [vmem:[#allocation4 + $0x20] sm:$0xff]
        %v2431 = vld [vmem:[#allocation4 + $0x28] sm:$0xff]
        %v2432 = vld [vmem:[#allocation4 + $0x30] sm:$0xff]
        %v2433 = vld [vmem:[#allocation4 + $0x38] sm:$0xff]
        %v2434 = vld [vmem:[#allocation4 + $0x40] sm:$0xff]
        %v2435 = vld [vmem:[#allocation4 + $0x48] sm:$0xff]
        %v2436 = vld [vmem:[#allocation4 + $0x50] sm:$0xff]
        %v2437 = vld [vmem:[#allocation4 + $0x58] sm:$0xff]
        %v2438 = vld [vmem:[#allocation4 + $0x60] sm:$0xff]
        %v2439 = vld [vmem:[#allocation4 + $0x68] sm:$0xff]
        %v2440 = vld [vmem:[#allocation4 + $0x70] sm:$0xff]
        %v2441 = vld [vmem:[#allocation4 + $0x78] sm:$0xff]
        %v2442 = vld [vmem:[#allocation4 + $0x80] sm:$0xff]
        %v2443 = vld [vmem:[#allocation4 + $0x88] sm:$0xff]
        %v2444 = vld [vmem:[#allocation4 + $0x90] sm:$0xff]
        %v2445 = vld [vmem:[#allocation4 + $0x98] sm:$0xff]
        %v2446 = vld [vmem:[#allocation4 + $0xa0] sm:$0xff]
        %v2447 = vld [vmem:[#allocation4 + $0xa8] sm:$0xff]
        %v2448 = vld [vmem:[#allocation4 + $0xb0] sm:$0xff]
        %v2449 = vld [vmem:[#allocation4 + $0xb8] sm:$0xff]
        %v2450 = vld [vmem:[#allocation4 + $0xc0] sm:$0xff]
        %v2451 = vld [vmem:[#allocation4 + $0xc8] sm:$0xff]
        %v2452 = vld [vmem:[#allocation4 + $0xd0] sm:$0xff]
        %v2453 = vld [vmem:[#allocation4 + $0xd8] sm:$0xff]
        %v2454 = vld [vmem:[#allocation4 + $0xe0] sm:$0xff]
        %v2455 = vld [vmem:[#allocation4 + $0xe8] sm:$0xff]
        %v2456 = vld [vmem:[#allocation4 + $0xf0] sm:$0xff]
        %v2457 = vld [vmem:[#allocation4 + $0xf8] sm:$0xff]
        %v2458 = vadd.f32 %v2394, %v2426
        %v2459 = vadd.f32 %v2395, %v2427
        %v2460 = vadd.f32 %v2396, %v2428
        %v2461 = vadd.f32 %v2397, %v2429
        %v2462 = vadd.f32 %v2398, %v2430
        %v2463 = vadd.f32 %v2399, %v2431
        %v2464 = vadd.f32 %v2400, %v2432
        %v2465 = vadd.f32 %v2401, %v2433
        %v2466 = vadd.f32 %v2402, %v2434
        %v2467 = vadd.f32 %v2403, %v2435
        %v2468 = vadd.f32 %v2404, %v2436
        %v2469 = vadd.f32 %v2405, %v2437
        %v2470 = vadd.f32 %v2406, %v2438
        %v2471 = vadd.f32 %v2407, %v2439
        %v2472 = vadd.f32 %v2408, %v2440
        %v2473 = vadd.f32 %v2409, %v2441
        %v2474 = vadd.f32 %v2410, %v2442
        %v2475 = vadd.f32 %v2411, %v2443
        %v2476 = vadd.f32 %v2412, %v2444
        %v2477 = vadd.f32 %v2413, %v2445
        %v2478 = vadd.f32 %v2414, %v2446
        %v2479 = vadd.f32 %v2415, %v2447
        %v2480 = vadd.f32 %v2416, %v2448
        %v2481 = vadd.f32 %v2417, %v2449
        %v2482 = vadd.f32 %v2418, %v2450
        %v2483 = vadd.f32 %v2419, %v2451
        %v2484 = vadd.f32 %v2420, %v2452
        %v2485 = vadd.f32 %v2421, %v2453
        %v2486 = vadd.f32 %v2422, %v2454
        %v2487 = vadd.f32 %v2423, %v2455
        %v2488 = vadd.f32 %v2424, %v2456
        %v2489 = vadd.f32 %v2425, %v2457
        %2490 = vst [vmem:[%s278] sm:$0xff] %v2458
        %2491 = vst [vmem:[%s278 + $0x8] sm:$0xff] %v2459
        %2492 = vst [vmem:[%s278 + $0x10] sm:$0xff] %v2460
        %2493 = vst [vmem:[%s278 + $0x18] sm:$0xff] %v2461
        %2494 = vst [vmem:[%s278 + $0x20] sm:$0xff] %v2462
        %2495 = vst [vmem:[%s278 + $0x28] sm:$0xff] %v2463
        %2496 = vst [vmem:[%s278 + $0x30] sm:$0xff] %v2464
        %2497 = vst [vmem:[%s278 + $0x38] sm:$0xff] %v2465
        %2498 = vst [vmem:[%s278 + $0x40] sm:$0xff] %v2466
        %2499 = vst [vmem:[%s278 + $0x48] sm:$0xff] %v2467
        %2500 = vst [vmem:[%s278 + $0x50] sm:$0xff] %v2468
        %2501 = vst [vmem:[%s278 + $0x58] sm:$0xff] %v2469
        %2502 = vst [vmem:[%s278 + $0x60] sm:$0xff] %v2470
        %2503 = vst [vmem:[%s278 + $0x68] sm:$0xff] %v2471
        %2504 = vst [vmem:[%s278 + $0x70] sm:$0xff] %v2472
        %2505 = vst [vmem:[%s278 + $0x78] sm:$0xff] %v2473
        %2506 = vst [vmem:[%s278 + $0x80] sm:$0xff] %v2474
        %2507 = vst [vmem:[%s278 + $0x88] sm:$0xff] %v2475
        %2508 = vst [vmem:[%s278 + $0x90] sm:$0xff] %v2476
        %2509 = vst [vmem:[%s278 + $0x98] sm:$0xff] %v2477
        %2510 = vst [vmem:[%s278 + $0xa0] sm:$0xff] %v2478
        %2511 = vst [vmem:[%s278 + $0xa8] sm:$0xff] %v2479
        %2512 = vst [vmem:[%s278 + $0xb0] sm:$0xff] %v2480
        %2513 = vst [vmem:[%s278 + $0xb8] sm:$0xff] %v2481
        %2514 = vst [vmem:[%s278 + $0xc0] sm:$0xff] %v2482
        %2515 = vst [vmem:[%s278 + $0xc8] sm:$0xff] %v2483
        %2516 = vst [vmem:[%s278 + $0xd0] sm:$0xff] %v2484
        %2517 = vst [vmem:[%s278 + $0xd8] sm:$0xff] %v2485
        %2518 = vst [vmem:[%s278 + $0xe0] sm:$0xff] %v2486
        %2519 = vst [vmem:[%s278 + $0xe8] sm:$0xff] %v2487
        %2520 = vst [vmem:[%s278 + $0xf0] sm:$0xff] %v2488
        %2521 = vst [vmem:[%s278 + $0xf8] sm:$0xff] %v2489
      $region48: #{fine_adain_res_blocks.2} parent=39 // pred_fallthru
        _
      %p2522 = scmp.lt.s32.totalorder %s20, 1
      %s2523 = scalar_select %p2522, %s20, 1
      %s2524 = smul.addr %s2523, 32
      %s2525 = smul.addr %s2524, 8
      %s2526 = scalar_lea.vmem %s5, %s2525
      // Predicated region
      $region49: #{fine_adain_res_blocks.2} parent=39 // pred_check
        %p2527 = pneg %p170
      $region50: #{fine_adain_res_blocks.2} parent=39 // pred_check_branch
        %2529 = sbr.rel (%p2527) target = $region52
      $region51: #{fine_adain_res_blocks.2} parent=39 // pred_region
        _
      $region52: #{fine_adain_res_blocks.2} parent=39 // pred_fallthru
        _
    $region40: #{fine_adain_res_blocks.2} parent=5 // pred_fallthru
      _
    %p2530 = scmp.le.s32.totalorder 2, %s11
    // Predicated region
    $region53: #{fine_adain_res_blocks.2} parent=5 // pred_check
      %p2531 = pneg %p2530
    $region54: #{fine_adain_res_blocks.2} parent=5 // pred_check_branch
      %2533 = sbr.rel (%p2531) target = $region56
    $region55: #{fine_adain_res_blocks.2} parent=5 // pred_region
      %s2534 = ssub.s32 %s11, 2
      // Predicated region
      $region57: #{fine_adain_res_blocks.2} parent=55 // pred_check
        %p2535 = pneg %p176
      $region58: #{fine_adain_res_blocks.2} parent=55 // pred_check_branch
        %2537 = sbr.rel (%p2535) target = $region60
      $region59: #{fine_adain_res_blocks.2} parent=55 // pred_region
        %p2538 = scmp.lt.s32.totalorder %s22, 1
        %s2539 = scalar_select %p2538, %s22, 1
        %s2540 = smul.addr %s2539, 32
        %s2541 = smul.addr %s2540, 8
        %s2542 = scalar_lea.vmem %s5, %s2541
      $region60: #{fine_adain_res_blocks.2} parent=55 // pred_fallthru
        _
    $region56: #{fine_adain_res_blocks.2} parent=5 // pred_fallthru
      _
  $region6: #{fine_adain_res_blocks.2} parent=0 // loop_footer
    %s15 = sadd.s32 1, %s11
  $region7: #{fine_adain_res_blocks.2} parent=0 // loop_footer_branch
    %10 = sbr.rel target = $region3
  $region8: #{fine_adain_res_blocks.2} parent=0 // loop_exit
    _

</llo_original>
